<compile_context>
chip_gen: v6e
topology: v6e:2x2x1
jax: 0.10.0
libtpu: 0.0.40
codegen_flags: <defaults>
</compile_context>

<pallas_src>
import jax
import jax.numpy as jnp
import numpy as np
from jax.experimental import pallas as pl
from jax.experimental.pallas import tpu as pltpu

NEG_SLOPE = 0.01   # nn.LeakyReLU default negative_slope
BN_EPS = 1e-5      # nn.BatchNorm1d default eps

SUBLANE = 8
LANE = 128
TK_MAX = 8192      # K-tile for the big first-layer weight stream (bf16, 2x buffered ≈ 32 MiB -> v7x-safe)
N_PAD = 128        # final logits padded to one full lane width; sliced outside the kernel


def _round_up(x, m):
    return (x + m - 1) // m * m


def mlp_head_kernel(x_ref, w1_ref, s1_ref, t1_ref,
                    w2_ref, s2_ref, t2_ref,
                    w3_ref, s3_ref, t3_ref,
                    w4_ref, b4_ref,
                    o_ref, acc_ref):
    """K-tiled Linear1 accumulation + fused BN/LeakyReLU + layers 2-4 epilogue."""
    k = pl.program_id(0)

    @pl.when(k == 0)
    def _():
        acc_ref[...] = jnp.zeros_like(acc_ref)

    # Stream one (TK, N1) slab of W1 per grid step; accumulate in f32 on the MXU.
    acc_ref[...] += jnp.dot(x_ref[...], w1_ref[...],
                            preferred_element_type=jnp.float32)

    @pl.when(k == pl.num_programs(0) - 1)
    def _():
        def bn_lrelu(z, s_ref, t_ref):
            # Linear bias already folded into t; BatchNorm1d (eval) folded into s, t.
            z = z * s_ref[...] + t_ref[...]
            return jnp.where(z >= 0, z, NEG_SLOPE * z)

        h = bn_lrelu(acc_ref[...], s1_ref, t1_ref)
        h = bn_lrelu(jnp.dot(h.astype(jnp.bfloat16), w2_ref[...],
                             preferred_element_type=jnp.float32), s2_ref, t2_ref)
        h = bn_lrelu(jnp.dot(h.astype(jnp.bfloat16), w3_ref[...],
                             preferred_element_type=jnp.float32), s3_ref, t3_ref)
        logits = jnp.dot(h.astype(jnp.bfloat16), w4_ref[...],
                         preferred_element_type=jnp.float32) + b4_ref[...]
        o_ref[...] = logits.astype(o_ref.dtype)


def caduceus_head(x, hidden_layers, final_w, final_b):
    """x: [B, D_in] flattened backbone hidden state (f32). Returns [B, n_out] logits."""
    B, D_in = x.shape
    n_out = final_w.shape[1]
    (w1, b1, s1, t1), (w2, b2, s2, t2), (w3, b3, s3, t3) = hidden_layers
    N1, N2, N3 = w1.shape[1], w2.shape[1], w3.shape[1]

    # ---- parameter folding / casting (done once offline in a real deployment) ----
    # Fold Linear bias into the BN shift:  (h@W + b)*s + t == (h@W)*s + (t + b*s)
    t1f = t1 + b1 * s1
    t2f = t2 + b2 * s2
    t3f = t3 + b3 * s3
    # bf16 weights halve the HBM bytes of the (dominant) weight stream.
    w2_bf = w2.astype(jnp.bfloat16)
    w3_bf = w3.astype(jnp.bfloat16)
    # Lane-dense final layer: pad the 2 logits up to 128 lanes; slice outside.
    w4_p = jnp.zeros((N3, N_PAD), jnp.bfloat16).at[:, :n_out].set(final_w.astype(jnp.bfloat16))
    b4_p = jnp.zeros((1, N_PAD), jnp.float32).at[:, :n_out].set(final_b)

    # ---- activation / W1 padding for K-tiling and MXU row utilization ----
    B_pad = _round_up(max(B, SUBLANE), SUBLANE)          # feed >= 8 MXU rows
    TK = min(TK_MAX, _round_up(D_in, LANE))              # K-tile, multiple of 128
    K_pad = _round_up(D_in, TK)
    n_k = K_pad // TK
    x_p = jnp.zeros((B_pad, K_pad), jnp.bfloat16).at[:B, :D_in].set(x.astype(jnp.bfloat16))
    w1_p = jnp.zeros((K_pad, N1), jnp.bfloat16).at[:D_in, :].set(w1.astype(jnp.bfloat16))

    # ---- cost hint so XLA can overlap the backbone with this memory-bound call ----
    flops = 2 * B_pad * (K_pad * N1 + N1 * N2 + N2 * N3 + N3 * N_PAD)
    bytes_accessed = int(
        x_p.size * 2 + w1_p.size * 2 + w2_bf.size * 2 + w3_bf.size * 2 + w4_p.size * 2
        + (s1.size + t1f.size + s2.size + t2f.size + s3.size + t3f.size + b4_p.size) * 4
        + B_pad * N_PAD * 4)

    out_p = pl.pallas_call(
        mlp_head_kernel,
        out_shape=jax.ShapeDtypeStruct((B_pad, N_PAD), jnp.float32),
        grid_spec=pltpu.PrefetchScalarGridSpec(
            num_scalar_prefetch=0,
            grid=(n_k,),
            in_specs=[
                pl.BlockSpec((B_pad, TK), lambda k: (0, k)),   # x: K-tiled
                pl.BlockSpec((TK, N1), lambda k: (k, 0)),      # W1: K-tiled (the ~1 GiB stream at real size)
                pl.BlockSpec((1, N1), lambda k: (0, 0)),       # BN1 scale
                pl.BlockSpec((1, N1), lambda k: (0, 0)),       # BN1 shift (bias folded)
                pl.BlockSpec((N1, N2), lambda k: (0, 0)),      # W2 (resident)
                pl.BlockSpec((1, N2), lambda k: (0, 0)),
                pl.BlockSpec((1, N2), lambda k: (0, 0)),
                pl.BlockSpec((N2, N3), lambda k: (0, 0)),      # W3 (resident)
                pl.BlockSpec((1, N3), lambda k: (0, 0)),
                pl.BlockSpec((1, N3), lambda k: (0, 0)),
                pl.BlockSpec((N3, N_PAD), lambda k: (0, 0)),   # W4 (lane-padded, resident)
                pl.BlockSpec((1, N_PAD), lambda k: (0, 0)),
            ],
            out_specs=pl.BlockSpec((B_pad, N_PAD), lambda k: (0, 0)),
            scratch_shapes=[pltpu.VMEM((B_pad, N1), jnp.float32)],   # f32 layer-1 accumulator
        ),
        compiler_params=pltpu.CompilerParams(
            dimension_semantics=("arbitrary",),          # K is a reduction axis
            vmem_limit_bytes=64 << 20,                   # double-buffered 16 MiB W1 tiles; fits v7x's 64 MiB
        ),
        cost_estimate=pl.CostEstimate(
            flops=flops, transcendentals=0, bytes_accessed=bytes_accessed),
    )(x_p, w1_p, s1, t1f, w2_bf, s2, t2f, w3_bf, s3, t3f, w4_p, b4_p)

    return out_p[:B, :n_out]


def make_layer_params(key, d_in, d_out, with_bn):
    kw, kb, kg, kbeta, km, kv = jax.random.split(key, 6)
    # PyTorch Linear weight is (out, in); store transposed (in, out) for x @ W.
    w = jax.random.normal(kw, (d_in, d_out), jnp.float32) * 0.02
    b = jax.random.normal(kb, (1, d_out), jnp.float32) * 0.02
    if not with_bn:
        return w, b
    gamma = 1.0 + 0.1 * jax.random.normal(kg, (1, d_out), jnp.float32)
    beta = 0.1 * jax.random.normal(kbeta, (1, d_out), jnp.float32)
    running_mean = 0.1 * jax.random.normal(km, (1, d_out), jnp.float32)
    running_var = jnp.abs(1.0 + 0.1 * jax.random.normal(kv, (1, d_out), jnp.float32))
    scale = gamma / jnp.sqrt(running_var + BN_EPS)
    shift = beta - running_mean * scale
    return w, b, scale, shift


def reference_head(x, hidden_layers, final_w, final_b):
    """Pure-JAX reference with the same bf16 weight/activation quantization as the kernel."""
    h = x.astype(jnp.bfloat16)
    for (w, b, s, t) in hidden_layers:
        z = jnp.dot(h, w.astype(jnp.bfloat16), preferred_element_type=jnp.float32)
        z = z * s + (t + b * s)
        h = jnp.where(z >= 0, z, NEG_SLOPE * z).astype(jnp.bfloat16)
    return jnp.dot(h, final_w.astype(jnp.bfloat16),
                   preferred_element_type=jnp.float32) + final_b


if __name__ == "__main__":
    key = jax.random.PRNGKey(0)

    # Small stand-in for the real (batch, seq_len=1001, emb_dim=256) backbone output.
    B, SEQ, EMB = 2, 8, 32
    D_IN = SEQ * EMB
    dims = [D_IN, 1024, 256, 128, 2]   # same head widths as the PyTorch module

    k_x, k1, k2, k3, k4 = jax.random.split(key, 5)
    hidden_state = jax.random.normal(k_x, (B, SEQ, EMB), jnp.float32)
    x = hidden_state.reshape(B, -1)    # hidden_state.view(B, -1)

    hidden_layers = [
        make_layer_params(k1, dims[0], dims[1], with_bn=True),
        make_layer_params(k2, dims[1], dims[2], with_bn=True),
        make_layer_params(k3, dims[2], dims[3], with_bn=True),
    ]
    final_w, final_b = make_layer_params(k4, dims[3], dims[4], with_bn=False)

    out = caduceus_head(x, hidden_layers, final_w, final_b)
    out = jax.block_until_ready(out)

    ref = reference_head(x, hidden_layers, final_w, final_b)
    np.testing.assert_allclose(np.asarray(out), np.asarray(ref), rtol=2e-3, atol=2e-3)
    assert out.shape == (B, 2)

    print("KERNEL_OK")
</pallas_src>

<mosaic_0001>
module attributes {stable_mosaic.version = 11 : i64} {
  func.func @mlp_head_kernel(%arg0: i32, %arg1: memref<8x256xbf16, #tpu.memory_space<vmem>>, %arg2: memref<256x1024xbf16, #tpu.memory_space<vmem>>, %arg3: memref<1x1024xf32, #tpu.memory_space<vmem>>, %arg4: memref<1x1024xf32, #tpu.memory_space<vmem>>, %arg5: memref<1024x256xbf16, #tpu.memory_space<vmem>>, %arg6: memref<1x256xf32, #tpu.memory_space<vmem>>, %arg7: memref<1x256xf32, #tpu.memory_space<vmem>>, %arg8: memref<256x128xbf16, #tpu.memory_space<vmem>>, %arg9: memref<1x128xf32, #tpu.memory_space<vmem>>, %arg10: memref<1x128xf32, #tpu.memory_space<vmem>>, %arg11: memref<128x128xbf16, #tpu.memory_space<vmem>>, %arg12: memref<1x128xf32, #tpu.memory_space<vmem>>, %arg13: memref<8x128xf32, #tpu.memory_space<vmem>>, %arg14: memref<8x1024xf32, #tpu.memory_space<vmem>>) attributes {dimension_semantics = [#tpu.dimension_semantics<arbitrary>], iteration_bounds = array<i64: 1>, scalar_prefetch = 0 : i64, scratch_operands = 1 : i64, tpu.core_type = #tpu.core_type<tc>, window_params = [{transform_indices = @transform_0, window_bounds = array<i64: 8, 256>}, {transform_indices = @transform_1, window_bounds = array<i64: 256, 1024>}, {pipeline_mode = #tpu.pipeline_mode<synchronous>, transform_indices = @transform_2, window_bounds = array<i64: 1, 1024>}, {pipeline_mode = #tpu.pipeline_mode<synchronous>, transform_indices = @transform_3, window_bounds = array<i64: 1, 1024>}, {pipeline_mode = #tpu.pipeline_mode<synchronous>, transform_indices = @transform_4, window_bounds = array<i64: 1024, 256>}, {pipeline_mode = #tpu.pipeline_mode<synchronous>, transform_indices = @transform_5, window_bounds = array<i64: 1, 256>}, {pipeline_mode = #tpu.pipeline_mode<synchronous>, transform_indices = @transform_6, window_bounds = array<i64: 1, 256>}, {pipeline_mode = #tpu.pipeline_mode<synchronous>, transform_indices = @transform_7, window_bounds = array<i64: 256, 128>}, {pipeline_mode = #tpu.pipeline_mode<synchronous>, transform_indices = @transform_8, window_bounds = array<i64: 1, 128>}, {pipeline_mode = #tpu.pipeline_mode<synchronous>, transform_indices = @transform_9, window_bounds = array<i64: 1, 128>}, {pipeline_mode = #tpu.pipeline_mode<synchronous>, transform_indices = @transform_10, window_bounds = array<i64: 128, 128>}, {pipeline_mode = #tpu.pipeline_mode<synchronous>, transform_indices = @transform_11, window_bounds = array<i64: 1, 128>}, {pipeline_mode = #tpu.pipeline_mode<synchronous>, transform_indices = @transform_12, window_bounds = array<i64: 8, 128>}]} {
    %c0_i32 = arith.constant 0 : i32
    %0 = arith.cmpi eq, %arg0, %c0_i32 : i32
    %1 = arith.extui %0 : i1 to i32
    %c0_i32_0 = arith.constant 0 : i32
    %2 = arith.cmpi ne, %1, %c0_i32_0 : i32
    scf.if %2 {
      %cst_10 = arith.constant 0.000000e+00 : f32
      %12 = vector.broadcast %cst_10 : f32 to vector<8x1024xf32>
      %c0_11 = arith.constant 0 : index
      %c0_12 = arith.constant 0 : index
      %13 = vector.load %arg14[%c0_11, %c0_12] : memref<8x1024xf32, #tpu.memory_space<vmem>>, vector<8x1024xf32>
      tpu.vector_store %arg14[%c0_11, %c0_12], %12 {strides = array<i32>} : memref<8x1024xf32, #tpu.memory_space<vmem>>, vector<8x1024xf32>,
    } else {
    }
    %c0 = arith.constant 0 : index
    %c0_1 = arith.constant 0 : index
    %3 = vector.load %arg14[%c0, %c0_1] : memref<8x1024xf32, #tpu.memory_space<vmem>>, vector<8x1024xf32>
    %c0_2 = arith.constant 0 : index
    %c0_3 = arith.constant 0 : index
    %4 = vector.load %arg1[%c0_2, %c0_3] : memref<8x256xbf16, #tpu.memory_space<vmem>>, vector<8x256xbf16>
    %c0_4 = arith.constant 0 : index
    %c0_5 = arith.constant 0 : index
    %5 = vector.load %arg2[%c0_4, %c0_5] : memref<256x1024xbf16, #tpu.memory_space<vmem>>, vector<256x1024xbf16>
    %cst = arith.constant dense<0.000000e+00> : vector<8x1024xf32>
    %6 = tpu.matmul %4, %5, %cst {dimension_numbers = #tpu.dot_dimension_numbers<[1], [0], [0], [1], [0, 0, 1, 1], [], []>} : vector<8x256xbf16>, vector<256x1024xbf16>, vector<8x1024xf32> -> vector<8x1024xf32>
    %7 = arith.addf %3, %6 : vector<8x1024xf32>
    %c0_6 = arith.constant 0 : index
    %c0_7 = arith.constant 0 : index
    %8 = vector.load %arg14[%c0_6, %c0_7] : memref<8x1024xf32, #tpu.memory_space<vmem>>, vector<8x1024xf32>
    tpu.vector_store %arg14[%c0_6, %c0_7], %7 {strides = array<i32>} : memref<8x1024xf32, #tpu.memory_space<vmem>>, vector<8x1024xf32>,
    %c0_i32_8 = arith.constant 0 : i32
    %9 = arith.cmpi eq, %arg0, %c0_i32_8 : i32
    %10 = arith.extui %9 : i1 to i32
    %c0_i32_9 = arith.constant 0 : i32
    %11 = arith.cmpi ne, %10, %c0_i32_9 : i32
    scf.if %11 {
      %c0_10 = arith.constant 0 : index
      %c0_11 = arith.constant 0 : index
      %12 = vector.load %arg14[%c0_10, %c0_11] : memref<8x1024xf32, #tpu.memory_space<vmem>>, vector<8x1024xf32>
      %c0_12 = arith.constant 0 : index
      %c0_13 = arith.constant 0 : index
      %13 = vector.load %arg3[%c0_12, %c0_13] : memref<1x1024xf32, #tpu.memory_space<vmem>>, vector<1x1024xf32>
      %14 = vector.broadcast %13 : vector<1x1024xf32> to vector<8x1024xf32>
      %15 = arith.mulf %12, %14 : vector<8x1024xf32>
      %c0_14 = arith.constant 0 : index
      %c0_15 = arith.constant 0 : index
      %16 = vector.load %arg4[%c0_14, %c0_15] : memref<1x1024xf32, #tpu.memory_space<vmem>>, vector<1x1024xf32>
      %17 = vector.broadcast %16 : vector<1x1024xf32> to vector<8x1024xf32>
      %18 = arith.addf %15, %17 : vector<8x1024xf32>
      %cst_16 = arith.constant 0.000000e+00 : f32
      %19 = vector.broadcast %cst_16 : f32 to vector<8x1024xf32>
      %20 = arith.cmpf oge, %18, %19 : vector<8x1024xf32>
      %cst_17 = arith.constant 0.00999999977 : f32
      %21 = vector.broadcast %cst_17 : f32 to vector<8x1024xf32>
      %22 = arith.mulf %21, %18 : vector<8x1024xf32>
      %23 = arith.select %20, %18, %22 : vector<8x1024xi1>, vector<8x1024xf32>
      %24 = arith.truncf %23 : vector<8x1024xf32> to vector<8x1024xbf16>
      %c0_18 = arith.constant 0 : index
      %c0_19 = arith.constant 0 : index
      %25 = vector.load %arg5[%c0_18, %c0_19] : memref<1024x256xbf16, #tpu.memory_space<vmem>>, vector<1024x256xbf16>
      %cst_20 = arith.constant dense<0.000000e+00> : vector<8x256xf32>
      %26 = tpu.matmul %24, %25, %cst_20 {dimension_numbers = #tpu.dot_dimension_numbers<[1], [0], [0], [1], [0, 0, 1, 1], [], []>} : vector<8x1024xbf16>, vector<1024x256xbf16>, vector<8x256xf32> -> vector<8x256xf32>
      %c0_21 = arith.constant 0 : index
      %c0_22 = arith.constant 0 : index
      %27 = vector.load %arg6[%c0_21, %c0_22] : memref<1x256xf32, #tpu.memory_space<vmem>>, vector<1x256xf32>
      %28 = vector.broadcast %27 : vector<1x256xf32> to vector<8x256xf32>
      %29 = arith.mulf %26, %28 : vector<8x256xf32>
      %c0_23 = arith.constant 0 : index
      %c0_24 = arith.constant 0 : index
      %30 = vector.load %arg7[%c0_23, %c0_24] : memref<1x256xf32, #tpu.memory_space<vmem>>, vector<1x256xf32>
      %31 = vector.broadcast %30 : vector<1x256xf32> to vector<8x256xf32>
      %32 = arith.addf %29, %31 : vector<8x256xf32>
      %cst_25 = arith.constant 0.000000e+00 : f32
      %33 = vector.broadcast %cst_25 : f32 to vector<8x256xf32>
      %34 = arith.cmpf oge, %32, %33 : vector<8x256xf32>
      %cst_26 = arith.constant 0.00999999977 : f32
      %35 = vector.broadcast %cst_26 : f32 to vector<8x256xf32>
      %36 = arith.mulf %35, %32 : vector<8x256xf32>
      %37 = arith.select %34, %32, %36 : vector<8x256xi1>, vector<8x256xf32>
      %38 = arith.truncf %37 : vector<8x256xf32> to vector<8x256xbf16>
      %c0_27 = arith.constant 0 : index
      %c0_28 = arith.constant 0 : index
      %39 = vector.load %arg8[%c0_27, %c0_28] : memref<256x128xbf16, #tpu.memory_space<vmem>>, vector<256x128xbf16>
      %cst_29 = arith.constant dense<0.000000e+00> : vector<8x128xf32>
      %40 = tpu.matmul %38, %39, %cst_29 {dimension_numbers = #tpu.dot_dimension_numbers<[1], [0], [0], [1], [0, 0, 1, 1], [], []>} : vector<8x256xbf16>, vector<256x128xbf16>, vector<8x128xf32> -> vector<8x128xf32>
      %c0_30 = arith.constant 0 : index
      %c0_31 = arith.constant 0 : index
      %41 = vector.load %arg9[%c0_30, %c0_31] : memref<1x128xf32, #tpu.memory_space<vmem>>, vector<1x128xf32>
      %42 = vector.broadcast %41 : vector<1x128xf32> to vector<8x128xf32>
      %43 = arith.mulf %40, %42 : vector<8x128xf32>
      %c0_32 = arith.constant 0 : index
      %c0_33 = arith.constant 0 : index
      %44 = vector.load %arg10[%c0_32, %c0_33] : memref<1x128xf32, #tpu.memory_space<vmem>>, vector<1x128xf32>
      %45 = vector.broadcast %44 : vector<1x128xf32> to vector<8x128xf32>
      %46 = arith.addf %43, %45 : vector<8x128xf32>
      %cst_34 = arith.constant 0.000000e+00 : f32
      %47 = vector.broadcast %cst_34 : f32 to vector<8x128xf32>
      %48 = arith.cmpf oge, %46, %47 : vector<8x128xf32>
      %cst_35 = arith.constant 0.00999999977 : f32
      %49 = vector.broadcast %cst_35 : f32 to vector<8x128xf32>
      %50 = arith.mulf %49, %46 : vector<8x128xf32>
      %51 = arith.select %48, %46, %50 : vector<8x128xi1>, vector<8x128xf32>
      %52 = arith.truncf %51 : vector<8x128xf32> to vector<8x128xbf16>
      %c0_36 = arith.constant 0 : index
      %c0_37 = arith.constant 0 : index
      %53 = vector.load %arg11[%c0_36, %c0_37] : memref<128x128xbf16, #tpu.memory_space<vmem>>, vector<128x128xbf16>
      %cst_38 = arith.constant dense<0.000000e+00> : vector<8x128xf32>
      %54 = tpu.matmul %52, %53, %cst_38 {dimension_numbers = #tpu.dot_dimension_numbers<[1], [0], [0], [1], [0, 0, 1, 1], [], []>} : vector<8x128xbf16>, vector<128x128xbf16>, vector<8x128xf32> -> vector<8x128xf32>
      %c0_39 = arith.constant 0 : index
      %c0_40 = arith.constant 0 : index
      %55 = vector.load %arg12[%c0_39, %c0_40] : memref<1x128xf32, #tpu.memory_space<vmem>>, vector<1x128xf32>
      %56 = vector.broadcast %55 : vector<1x128xf32> to vector<8x128xf32>
      %57 = arith.addf %54, %56 : vector<8x128xf32>
      %c0_41 = arith.constant 0 : index
      %c0_42 = arith.constant 0 : index
      %58 = vector.load %arg13[%c0_41, %c0_42] : memref<8x128xf32, #tpu.memory_space<vmem>>, vector<8x128xf32>
      tpu.vector_store %arg13[%c0_41, %c0_42], %57 {strides = array<i32>} : memref<8x128xf32, #tpu.memory_space<vmem>>, vector<8x128xf32>,
    } else {
    }
    return
  }
  func.func @transform_0(%arg0: i32) -> (i32, i32) {
    %c0_i32 = arith.constant 0 : i32
    %c0_i32_0 = arith.constant 0 : i32
    return %c0_i32, %arg0 : i32, i32
  }
  func.func @transform_1(%arg0: i32) -> (i32, i32) {
    %c0_i32 = arith.constant 0 : i32
    %c0_i32_0 = arith.constant 0 : i32
    return %arg0, %c0_i32 : i32, i32
  }
  func.func @transform_2(%arg0: i32) -> (i32, i32) {
    %c0_i32 = arith.constant 0 : i32
    %c0_i32_0 = arith.constant 0 : i32
    %c0_i32_1 = arith.constant 0 : i32
    return %c0_i32, %c0_i32_0 : i32, i32
  }
  func.func @transform_3(%arg0: i32) -> (i32, i32) {
    %c0_i32 = arith.constant 0 : i32
    %c0_i32_0 = arith.constant 0 : i32
    %c0_i32_1 = arith.constant 0 : i32
    return %c0_i32, %c0_i32_0 : i32, i32
  }
  func.func @transform_4(%arg0: i32) -> (i32, i32) {
    %c0_i32 = arith.constant 0 : i32
    %c0_i32_0 = arith.constant 0 : i32
    %c0_i32_1 = arith.constant 0 : i32
    return %c0_i32, %c0_i32_0 : i32, i32
  }
  func.func @transform_5(%arg0: i32) -> (i32, i32) {
    %c0_i32 = arith.constant 0 : i32
    %c0_i32_0 = arith.constant 0 : i32
    %c0_i32_1 = arith.constant 0 : i32
    return %c0_i32, %c0_i32_0 : i32, i32
  }
  func.func @transform_6(%arg0: i32) -> (i32, i32) {
    %c0_i32 = arith.constant 0 : i32
    %c0_i32_0 = arith.constant 0 : i32
    %c0_i32_1 = arith.constant 0 : i32
    return %c0_i32, %c0_i32_0 : i32, i32
  }
  func.func @transform_7(%arg0: i32) -> (i32, i32) {
    %c0_i32 = arith.constant 0 : i32
    %c0_i32_0 = arith.constant 0 : i32
    %c0_i32_1 = arith.constant 0 : i32
    return %c0_i32, %c0_i32_0 : i32, i32
  }
  func.func @transform_8(%arg0: i32) -> (i32, i32) {
    %c0_i32 = arith.constant 0 : i32
    %c0_i32_0 = arith.constant 0 : i32
    %c0_i32_1 = arith.constant 0 : i32
    return %c0_i32, %c0_i32_0 : i32, i32
  }
  func.func @transform_9(%arg0: i32) -> (i32, i32) {
    %c0_i32 = arith.constant 0 : i32
    %c0_i32_0 = arith.constant 0 : i32
    %c0_i32_1 = arith.constant 0 : i32
    return %c0_i32, %c0_i32_0 : i32, i32
  }
  func.func @transform_10(%arg0: i32) -> (i32, i32) {
    %c0_i32 = arith.constant 0 : i32
    %c0_i32_0 = arith.constant 0 : i32
    %c0_i32_1 = arith.constant 0 : i32
    return %c0_i32, %c0_i32_0 : i32, i32
  }
  func.func @transform_11(%arg0: i32) -> (i32, i32) {
    %c0_i32 = arith.constant 0 : i32
    %c0_i32_0 = arith.constant 0 : i32
    %c0_i32_1 = arith.constant 0 : i32
    return %c0_i32, %c0_i32_0 : i32, i32
  }
  func.func @transform_12(%arg0: i32) -> (i32, i32) {
    %c0_i32 = arith.constant 0 : i32
    %c0_i32_0 = arith.constant 0 : i32
    %c0_i32_1 = arith.constant 0 : i32
    return %c0_i32, %c0_i32_0 : i32, i32
  }
}

</mosaic_0001>

<llo_original>
// kernel: tpu_custom_call.1
$region0: #{tpu_custom_call.1}
  #allocation0 [shape = 'u32[]', space=smem, size = 0x4, offset = 0x4, fixed_abs, tag = 'smem constant byte address 0x4 - core index']
  #allocation1 [shape = 'u32[144,128]{1,0:T(1,128)}', space=vmem, size = 0x12000, scoped, tag = 'internal scratch']
  #allocation2 [shape = 'f32[8,1024]{1,0:T(8,128)}', space=vmem, size = 0x8000, scoped, tag = 'scratch operand']
  %s0 = inlined_call_operand.hbm [shape: bf16[8,256], index: 0, kind: input, shape index: {}]
  %s1 = inlined_call_operand.hbm [shape: bf16[256,1024], index: 1, kind: input, shape index: {}]
  %s2 = inlined_call_operand.hbm [shape: f32[1,1024], index: 2, kind: input, shape index: {}]
  %s3 = inlined_call_operand.hbm [shape: f32[1,1024], index: 3, kind: input, shape index: {}]
  %s4 = inlined_call_operand.hbm [shape: bf16[1024,256], index: 4, kind: input, shape index: {}]
  %s5 = inlined_call_operand.vmem [shape: f32[1,256], index: 5, kind: input, shape index: {}]
  %s6 = inlined_call_operand.vmem [shape: f32[1,256], index: 6, kind: input, shape index: {}]
  %s7 = inlined_call_operand.hbm [shape: bf16[256,128], index: 7, kind: input, shape index: {}]
  %s8 = inlined_call_operand.vmem [shape: f32[1,128], index: 8, kind: input, shape index: {}]
  %s9 = inlined_call_operand.vmem [shape: f32[1,128], index: 9, kind: input, shape index: {}]
  %s10 = inlined_call_operand.hbm [shape: bf16[128,128], index: 10, kind: input, shape index: {}]
  %s11 = inlined_call_operand.vmem [shape: f32[1,128], index: 11, kind: input, shape index: {}]
  %s12 = inlined_call_operand.hbm [shape: f32[8,128], index: 12, kind: output, shape index: {}]
  %s13 = sld [smem:[#allocation0]]
  $region94: #{tpu_custom_call.1} parent=0
    _
  %s15 = ssub.s32 1, %s13
  %s16 = scalar_select 0, %s15, %s13
  $region1: #{tpu_custom_call.1} parent=0
    #allocation3 [shape = 'u8[4096]{0}', space=vmem, size = 0x1000, scoped, tag = 'input window, operand 0, single buffered']
    #allocation4 [shape = 's32[1]{0}', space=sflag, size = 0x4, scoped, tag = 'scoped memory for tpu_custom_call.1']
    #allocation5 [shape = 's32[1]{0}', space=sflag, size = 0x4, scoped, tag = 'scoped memory for tpu_custom_call.1']
    #allocation6 [shape = 'u8[524288]{0}', space=vmem, size = 0x80000, scoped, tag = 'input window, operand 1, single buffered']
    #allocation7 [shape = 's32[1]{0}', space=sflag, size = 0x4, scoped, tag = 'scoped memory for tpu_custom_call.1']
    #allocation8 [shape = 'u8[4096]{0}', space=vmem, size = 0x1000, scoped, tag = 'input window, operand 2, single buffered']
    #allocation9 [shape = 'u8[4096]{0}', space=vmem, size = 0x1000, scoped, tag = 'input window, operand 3, single buffered']
    #allocation10 [shape = 's32[1]{0}', space=sflag, size = 0x4, scoped, tag = 'scoped memory for tpu_custom_call.1']
    #allocation11 [shape = 'u8[524288]{0}', space=vmem, size = 0x80000, scoped, tag = 'input window, operand 4, single buffered']
    #allocation12 [shape = 'u8[65536]{0}', space=vmem, size = 0x10000, scoped, tag = 'input window, operand 7, single buffered']
    #allocation13 [shape = 's32[1]{0}', space=sflag, size = 0x4, scoped, tag = 'scoped memory for tpu_custom_call.1']
    #allocation14 [shape = 'u8[32768]{0}', space=vmem, size = 0x8000, scoped, tag = 'input window, operand 10, single buffered']
    #allocation15 [shape = 'u8[4096]{0}', space=vmem, size = 0x1000, scoped, tag = 'output window, operand 0, single buffered']
    %17 = vsyncpa [#allocation4], 0
    %18 = vsyncpa [#allocation7], 0
    %19 = vsyncpa [#allocation10], 0
    %20 = vsyncpa [#allocation13], 0
    %21 = vsyncpa [#allocation5], 0
    // Predicated region
    $region2: #{tpu_custom_call.1} parent=1 // pred_check
      _
    $region3: #{tpu_custom_call.1} parent=1 // pred_check_branch
      %23 = sbr.rel (0) target = $region5
    $region4: #{tpu_custom_call.1} parent=1 // pred_region
      %s25 = ssub.s32 128, 128
      %26 = vsyncadd [#allocation4], %s25
      %s28 = sshll.u32 [#allocation3], 4
      %s29 = int_to_ptr.vmem [resolvable:$true] %s28
      %31 = dma.hbm_to_vmem [thread:$0]  %s0, 128, %s29, [#allocation4]
    $region5: #{tpu_custom_call.1} parent=1 // pred_fallthru
      _
    // Predicated region
    $region6: #{tpu_custom_call.1} parent=1 // pred_check
      _
    $region7: #{tpu_custom_call.1} parent=1 // pred_check_branch
      %33 = sbr.rel (0) target = $region9
    $region8: #{tpu_custom_call.1} parent=1 // pred_region
      %s35 = ssub.s32 16384, 16384
      %36 = vsyncadd [#allocation7], %s35
      %s37 = sshll.u32 [#allocation6], 4
      %s38 = int_to_ptr.vmem [resolvable:$true] %s37
      %43 = dma.hbm_to_vmem [thread:$0]  %s1, 16384, %s38, [#allocation7], 512, 512, 32
    $region9: #{tpu_custom_call.1} parent=1 // pred_fallthru
      _
    // Predicated region
    $region10: #{tpu_custom_call.1} parent=1 // pred_check
      _
    $region11: #{tpu_custom_call.1} parent=1 // pred_check_branch
      %45 = sbr.rel (0) target = $region13
    $region12: #{tpu_custom_call.1} parent=1 // pred_region
      %s47 = ssub.s32 128, 128
      %48 = vsyncadd [#allocation7], %s47
      %s50 = sshll.u32 [#allocation8], 4
      %s51 = int_to_ptr.vmem [resolvable:$true] %s50
      %53 = dma.hbm_to_vmem [thread:$0]  %s2, 128, %s51, [#allocation7]
    $region13: #{tpu_custom_call.1} parent=1 // pred_fallthru
      _
    // Predicated region
    $region14: #{tpu_custom_call.1} parent=1 // pred_check
      _
    $region15: #{tpu_custom_call.1} parent=1 // pred_check_branch
      %55 = sbr.rel (0) target = $region17
    $region16: #{tpu_custom_call.1} parent=1 // pred_region
      %s57 = ssub.s32 128, 128
      %58 = vsyncadd [#allocation10], %s57
      %s60 = sshll.u32 [#allocation9], 4
      %s61 = int_to_ptr.vmem [resolvable:$true] %s60
      %63 = dma.hbm_to_vmem [thread:$0]  %s3, 128, %s61, [#allocation10]
    $region17: #{tpu_custom_call.1} parent=1 // pred_fallthru
      _
    // Predicated region
    $region18: #{tpu_custom_call.1} parent=1 // pred_check
      _
    $region19: #{tpu_custom_call.1} parent=1 // pred_check_branch
      %65 = sbr.rel (0) target = $region21
    $region20: #{tpu_custom_call.1} parent=1 // pred_region
      %s67 = ssub.s32 16384, 16384
      %68 = vsyncadd [#allocation10], %s67
      %s69 = sshll.u32 [#allocation11], 4
      %s70 = int_to_ptr.vmem [resolvable:$true] %s69
      %75 = dma.hbm_to_vmem [thread:$0]  %s4, 16384, %s70, [#allocation10], 128, 128, 8
    $region21: #{tpu_custom_call.1} parent=1 // pred_fallthru
      _
    // Predicated region
    $region22: #{tpu_custom_call.1} parent=1 // pred_check
      _
    $region23: #{tpu_custom_call.1} parent=1 // pred_check_branch
      %77 = sbr.rel (0) target = $region25
    $region24: #{tpu_custom_call.1} parent=1 // pred_region
      _
    $region25: #{tpu_custom_call.1} parent=1 // pred_fallthru
      _
    // Predicated region
    $region26: #{tpu_custom_call.1} parent=1 // pred_check
      _
    $region27: #{tpu_custom_call.1} parent=1 // pred_check_branch
      %79 = sbr.rel (0) target = $region29
    $region28: #{tpu_custom_call.1} parent=1 // pred_region
      _
    $region29: #{tpu_custom_call.1} parent=1 // pred_fallthru
      _
    // Predicated region
    $region30: #{tpu_custom_call.1} parent=1 // pred_check
      _
    $region31: #{tpu_custom_call.1} parent=1 // pred_check_branch
      %81 = sbr.rel (0) target = $region33
    $region32: #{tpu_custom_call.1} parent=1 // pred_region
      %s83 = ssub.s32 2048, 2048
      %84 = vsyncadd [#allocation13], %s83
      %s85 = sshll.u32 [#allocation12], 4
      %s86 = int_to_ptr.vmem [resolvable:$true] %s85
      %91 = dma.hbm_to_vmem [thread:$0]  %s7, 2048, %s86, [#allocation13], 64, 64, 4
    $region33: #{tpu_custom_call.1} parent=1 // pred_fallthru
      _
    // Predicated region
    $region34: #{tpu_custom_call.1} parent=1 // pred_check
      _
    $region35: #{tpu_custom_call.1} parent=1 // pred_check_branch
      %93 = sbr.rel (0) target = $region37
    $region36: #{tpu_custom_call.1} parent=1 // pred_region
      _
    $region37: #{tpu_custom_call.1} parent=1 // pred_fallthru
      _
    // Predicated region
    $region38: #{tpu_custom_call.1} parent=1 // pred_check
      _
    $region39: #{tpu_custom_call.1} parent=1 // pred_check_branch
      %95 = sbr.rel (0) target = $region41
    $region40: #{tpu_custom_call.1} parent=1 // pred_region
      _
    $region41: #{tpu_custom_call.1} parent=1 // pred_fallthru
      _
    // Predicated region
    $region42: #{tpu_custom_call.1} parent=1 // pred_check
      _
    $region43: #{tpu_custom_call.1} parent=1 // pred_check_branch
      %97 = sbr.rel (0) target = $region45
    $region44: #{tpu_custom_call.1} parent=1 // pred_region
      %s99 = ssub.s32 1024, 1024
      %100 = vsyncadd [#allocation13], %s99
      %s101 = sshll.u32 [#allocation14], 4
      %s102 = int_to_ptr.vmem [resolvable:$true] %s101
      %107 = dma.hbm_to_vmem [thread:$0]  %s10, 1024, %s102, [#allocation13], 64, 64, 4
    $region45: #{tpu_custom_call.1} parent=1 // pred_fallthru
      _
    // Predicated region
    $region46: #{tpu_custom_call.1} parent=1 // pred_check
      _
    $region47: #{tpu_custom_call.1} parent=1 // pred_check_branch
      %109 = sbr.rel (0) target = $region49
    $region48: #{tpu_custom_call.1} parent=1 // pred_region
      _
    $region49: #{tpu_custom_call.1} parent=1 // pred_fallthru
      _
    // Predicated region
    $region50: #{tpu_custom_call.1} parent=1 // pred_check
      _
    $region51: #{tpu_custom_call.1} parent=1 // pred_check_branch
      %111 = sbr.rel (0) target = $region53
    $region52: #{tpu_custom_call.1} parent=1 // pred_region
      %112 = dma.done [#allocation4], 128
    $region53: #{tpu_custom_call.1} parent=1 // pred_fallthru
      _
    // Predicated region
    $region54: #{tpu_custom_call.1} parent=1 // pred_check
      _
    $region55: #{tpu_custom_call.1} parent=1 // pred_check_branch
      %114 = sbr.rel (0) target = $region57
    $region56: #{tpu_custom_call.1} parent=1 // pred_region
      %115 = dma.done [#allocation7], 16384
    $region57: #{tpu_custom_call.1} parent=1 // pred_fallthru
      _
    // Predicated region
    $region58: #{tpu_custom_call.1} parent=1 // pred_check
      _
    $region59: #{tpu_custom_call.1} parent=1 // pred_check_branch
      %117 = sbr.rel (0) target = $region61
    $region60: #{tpu_custom_call.1} parent=1 // pred_region
      %118 = dma.done [#allocation7], 128
    $region61: #{tpu_custom_call.1} parent=1 // pred_fallthru
      _
    // Predicated region
    $region62: #{tpu_custom_call.1} parent=1 // pred_check
      _
    $region63: #{tpu_custom_call.1} parent=1 // pred_check_branch
      %120 = sbr.rel (0) target = $region65
    $region64: #{tpu_custom_call.1} parent=1 // pred_region
      %121 = dma.done [#allocation10], 128
    $region65: #{tpu_custom_call.1} parent=1 // pred_fallthru
      _
    // Predicated region
    $region66: #{tpu_custom_call.1} parent=1 // pred_check
      _
    $region67: #{tpu_custom_call.1} parent=1 // pred_check_branch
      %123 = sbr.rel (0) target = $region69
    $region68: #{tpu_custom_call.1} parent=1 // pred_region
      %124 = dma.done [#allocation10], 16384
    $region69: #{tpu_custom_call.1} parent=1 // pred_fallthru
      _
    // Predicated region
    $region70: #{tpu_custom_call.1} parent=1 // pred_check
      _
    $region71: #{tpu_custom_call.1} parent=1 // pred_check_branch
      %126 = sbr.rel (0) target = $region73
    $region72: #{tpu_custom_call.1} parent=1 // pred_region
      %127 = dma.done [#allocation13], 2048
    $region73: #{tpu_custom_call.1} parent=1 // pred_fallthru
      _
    // Predicated region
    $region74: #{tpu_custom_call.1} parent=1 // pred_check
      _
    $region75: #{tpu_custom_call.1} parent=1 // pred_check_branch
      %129 = sbr.rel (0) target = $region77
    $region76: #{tpu_custom_call.1} parent=1 // pred_region
      %130 = dma.done [#allocation13], 1024
    $region77: #{tpu_custom_call.1} parent=1 // pred_fallthru
      _
    %p132 = scmp.eq.s32.totalorder 0, 0
    // Predicated region
    $region78: #{tpu_custom_call.1} parent=1 // pred_check
      %p133 = pneg %p132
    $region79: #{tpu_custom_call.1} parent=1 // pred_check_branch
      %135 = sbr.rel (%p133) target = $region81
    $region80: #{tpu_custom_call.1} parent=1 // pred_region
      %136 = vst [vmem:[#allocation2] sm:$0xff] 0.0
      %137 = vst [vmem:[#allocation2 + $0x8] sm:$0xff] 0.0
      %138 = vst [vmem:[#allocation2 + $0x10] sm:$0xff] 0.0
      %139 = vst [vmem:[#allocation2 + $0x18] sm:$0xff] 0.0
      %140 = vst [vmem:[#allocation2 + $0x20] sm:$0xff] 0.0
      %141 = vst [vmem:[#allocation2 + $0x28] sm:$0xff] 0.0
      %142 = vst [vmem:[#allocation2 + $0x30] sm:$0xff] 0.0
      %143 = vst [vmem:[#allocation2 + $0x38] sm:$0xff] 0.0
    $region81: #{tpu_custom_call.1} parent=1 // pred_fallthru
      _
    %v144 = vld [vmem:[#allocation2] sm:$0xff]
    %v145 = vld [vmem:[#allocation2 + $0x8] sm:$0xff]
    %v146 = vld [vmem:[#allocation2 + $0x10] sm:$0xff]
    %v147 = vld [vmem:[#allocation2 + $0x18] sm:$0xff]
    %v148 = vld [vmem:[#allocation2 + $0x20] sm:$0xff]
    %v149 = vld [vmem:[#allocation2 + $0x28] sm:$0xff]
    %v150 = vld [vmem:[#allocation2 + $0x30] sm:$0xff]
    %v151 = vld [vmem:[#allocation2 + $0x38] sm:$0xff]
    %v152 = vld [vmem:[#allocation3] sm:$0xff]
    %v153 = vld [vmem:[#allocation6] sm:$0xff]
    %v154 = vld [vmem:[#allocation6 + $0x8] sm:$0xff]
    %v155 = vld [vmem:[#allocation6 + $0x10] sm:$0xff]
    %v156 = vld [vmem:[#allocation6 + $0x18] sm:$0xff]
    %v157 = vld [vmem:[#allocation6 + $0x20] sm:$0xff]
    %v158 = vld [vmem:[#allocation6 + $0x28] sm:$0xff]
    %v159 = vld [vmem:[#allocation6 + $0x30] sm:$0xff]
    %v160 = vld [vmem:[#allocation6 + $0x38] sm:$0xff]
    %v161 = vld [vmem:[#allocation6 + $0x40] sm:$0xff]
    %v162 = vld [vmem:[#allocation6 + $0x48] sm:$0xff]
    %v163 = vld [vmem:[#allocation6 + $0x50] sm:$0xff]
    %v164 = vld [vmem:[#allocation6 + $0x58] sm:$0xff]
    %v165 = vld [vmem:[#allocation6 + $0x60] sm:$0xff]
    %v166 = vld [vmem:[#allocation6 + $0x68] sm:$0xff]
    %v167 = vld [vmem:[#allocation6 + $0x70] sm:$0xff]
    %v168 = vld [vmem:[#allocation6 + $0x78] sm:$0xff]
    %v169 = vld [vmem:[#allocation6 + $0x80] sm:$0xff]
    %v170 = vld [vmem:[#allocation6 + $0x88] sm:$0xff]
    %v171 = vld [vmem:[#allocation6 + $0x90] sm:$0xff]
    %v172 = vld [vmem:[#allocation6 + $0x98] sm:$0xff]
    %v173 = vld [vmem:[#allocation6 + $0xa0] sm:$0xff]
    %v174 = vld [vmem:[#allocation6 + $0xa8] sm:$0xff]
    %v175 = vld [vmem:[#allocation6 + $0xb0] sm:$0xff]
    %v176 = vld [vmem:[#allocation6 + $0xb8] sm:$0xff]
    %v177 = vld [vmem:[#allocation6 + $0xc0] sm:$0xff]
    %v178 = vld [vmem:[#allocation6 + $0xc8] sm:$0xff]
    %v179 = vld [vmem:[#allocation6 + $0xd0] sm:$0xff]
    %v180 = vld [vmem:[#allocation6 + $0xd8] sm:$0xff]
    %v181 = vld [vmem:[#allocation6 + $0xe0] sm:$0xff]
    %v182 = vld [vmem:[#allocation6 + $0xe8] sm:$0xff]
    %v183 = vld [vmem:[#allocation6 + $0xf0] sm:$0xff]
    %v184 = vld [vmem:[#allocation6 + $0xf8] sm:$0xff]
    %v185 = vld [vmem:[#allocation6 + $0x100] sm:$0xff]
    %v186 = vld [vmem:[#allocation6 + $0x108] sm:$0xff]
    %v187 = vld [vmem:[#allocation6 + $0x110] sm:$0xff]
    %v188 = vld [vmem:[#allocation6 + $0x118] sm:$0xff]
    %v189 = vld [vmem:[#allocation6 + $0x120] sm:$0xff]
    %v190 = vld [vmem:[#allocation6 + $0x128] sm:$0xff]
    %v191 = vld [vmem:[#allocation6 + $0x130] sm:$0xff]
    %v192 = vld [vmem:[#allocation6 + $0x138] sm:$0xff]
    %v193 = vld [vmem:[#allocation6 + $0x140] sm:$0xff]
    %v194 = vld [vmem:[#allocation6 + $0x148] sm:$0xff]
    %v195 = vld [vmem:[#allocation6 + $0x150] sm:$0xff]
    %v196 = vld [vmem:[#allocation6 + $0x158] sm:$0xff]
    %v197 = vld [vmem:[#allocation6 + $0x160] sm:$0xff]
    %v198 = vld [vmem:[#allocation6 + $0x168] sm:$0xff]
    %v199 = vld [vmem:[#allocation6 + $0x170] sm:$0xff]
    %v200 = vld [vmem:[#allocation6 + $0x178] sm:$0xff]
    %v201 = vld [vmem:[#allocation6 + $0x180] sm:$0xff]
    %v202 = vld [vmem:[#allocation6 + $0x188] sm:$0xff]
    %v203 = vld [vmem:[#allocation6 + $0x190] sm:$0xff]
    %v204 = vld [vmem:[#allocation6 + $0x198] sm:$0xff]
    %v205 = vld [vmem:[#allocation6 + $0x1a0] sm:$0xff]
    %v206 = vld [vmem:[#allocation6 + $0x1a8] sm:$0xff]
    %v207 = vld [vmem:[#allocation6 + $0x1b0] sm:$0xff]
    %v208 = vld [vmem:[#allocation6 + $0x1b8] sm:$0xff]
    %v209 = vld [vmem:[#allocation6 + $0x1c0] sm:$0xff]
    %v210 = vld [vmem:[#allocation6 + $0x1c8] sm:$0xff]
    %v211 = vld [vmem:[#allocation6 + $0x1d0] sm:$0xff]
    %v212 = vld [vmem:[#allocation6 + $0x1d8] sm:$0xff]
    %v213 = vld [vmem:[#allocation6 + $0x1e0] sm:$0xff]
    %v214 = vld [vmem:[#allocation6 + $0x1e8] sm:$0xff]
    %v215 = vld [vmem:[#allocation6 + $0x1f0] sm:$0xff]
    %v216 = vld [vmem:[#allocation6 + $0x1f8] sm:$0xff]
    %v217 = vld [vmem:[#allocation6 + $0x200] sm:$0xff]
    %v218 = vld [vmem:[#allocation6 + $0x208] sm:$0xff]
    %v219 = vld [vmem:[#allocation6 + $0x210] sm:$0xff]
    %v220 = vld [vmem:[#allocation6 + $0x218] sm:$0xff]
    %v221 = vld [vmem:[#allocation6 + $0x220] sm:$0xff]
    %v222 = vld [vmem:[#allocation6 + $0x228] sm:$0xff]
    %v223 = vld [vmem:[#allocation6 + $0x230] sm:$0xff]
    %v224 = vld [vmem:[#allocation6 + $0x238] sm:$0xff]
    %v225 = vld [vmem:[#allocation6 + $0x240] sm:$0xff]
    %v226 = vld [vmem:[#allocation6 + $0x248] sm:$0xff]
    %v227 = vld [vmem:[#allocation6 + $0x250] sm:$0xff]
    %v228 = vld [vmem:[#allocation6 + $0x258] sm:$0xff]
    %v229 = vld [vmem:[#allocation6 + $0x260] sm:$0xff]
    %v230 = vld [vmem:[#allocation6 + $0x268] sm:$0xff]
    %v231 = vld [vmem:[#allocation6 + $0x270] sm:$0xff]
    %v232 = vld [vmem:[#allocation6 + $0x278] sm:$0xff]
    %v233 = vld [vmem:[#allocation6 + $0x280] sm:$0xff]
    %v234 = vld [vmem:[#allocation6 + $0x288] sm:$0xff]
    %v235 = vld [vmem:[#allocation6 + $0x290] sm:$0xff]
    %v236 = vld [vmem:[#allocation6 + $0x298] sm:$0xff]
    %v237 = vld [vmem:[#allocation6 + $0x2a0] sm:$0xff]
    %v238 = vld [vmem:[#allocation6 + $0x2a8] sm:$0xff]
    %v239 = vld [vmem:[#allocation6 + $0x2b0] sm:$0xff]
    %v240 = vld [vmem:[#allocation6 + $0x2b8] sm:$0xff]
    %v241 = vld [vmem:[#allocation6 + $0x2c0] sm:$0xff]
    %v242 = vld [vmem:[#allocation6 + $0x2c8] sm:$0xff]
    %v243 = vld [vmem:[#allocation6 + $0x2d0] sm:$0xff]
    %v244 = vld [vmem:[#allocation6 + $0x2d8] sm:$0xff]
    %v245 = vld [vmem:[#allocation6 + $0x2e0] sm:$0xff]
    %v246 = vld [vmem:[#allocation6 + $0x2e8] sm:$0xff]
    %v247 = vld [vmem:[#allocation6 + $0x2f0] sm:$0xff]
    %v248 = vld [vmem:[#allocation6 + $0x2f8] sm:$0xff]
    %v249 = vld [vmem:[#allocation6 + $0x300] sm:$0xff]
    %v250 = vld [vmem:[#allocation6 + $0x308] sm:$0xff]
    %v251 = vld [vmem:[#allocation6 + $0x310] sm:$0xff]
    %v252 = vld [vmem:[#allocation6 + $0x318] sm:$0xff]
    %v253 = vld [vmem:[#allocation6 + $0x320] sm:$0xff]
    %v254 = vld [vmem:[#allocation6 + $0x328] sm:$0xff]
    %v255 = vld [vmem:[#allocation6 + $0x330] sm:$0xff]
    %v256 = vld [vmem:[#allocation6 + $0x338] sm:$0xff]
    %v257 = vld [vmem:[#allocation6 + $0x340] sm:$0xff]
    %v258 = vld [vmem:[#allocation6 + $0x348] sm:$0xff]
    %v259 = vld [vmem:[#allocation6 + $0x350] sm:$0xff]
    %v260 = vld [vmem:[#allocation6 + $0x358] sm:$0xff]
    %v261 = vld [vmem:[#allocation6 + $0x360] sm:$0xff]
    %v262 = vld [vmem:[#allocation6 + $0x368] sm:$0xff]
    %v263 = vld [vmem:[#allocation6 + $0x370] sm:$0xff]
    %v264 = vld [vmem:[#allocation6 + $0x378] sm:$0xff]
    %v265 = vld [vmem:[#allocation6 + $0x380] sm:$0xff]
    %v266 = vld [vmem:[#allocation6 + $0x388] sm:$0xff]
    %v267 = vld [vmem:[#allocation6 + $0x390] sm:$0xff]
    %v268 = vld [vmem:[#allocation6 + $0x398] sm:$0xff]
    %v269 = vld [vmem:[#allocation6 + $0x3a0] sm:$0xff]
    %v270 = vld [vmem:[#allocation6 + $0x3a8] sm:$0xff]
    %v271 = vld [vmem:[#allocation6 + $0x3b0] sm:$0xff]
    %v272 = vld [vmem:[#allocation6 + $0x3b8] sm:$0xff]
    %v273 = vld [vmem:[#allocation6 + $0x3c0] sm:$0xff]
    %v274 = vld [vmem:[#allocation6 + $0x3c8] sm:$0xff]
    %v275 = vld [vmem:[#allocation6 + $0x3d0] sm:$0xff]
    %v276 = vld [vmem:[#allocation6 + $0x3d8] sm:$0xff]
    %v277 = vld [vmem:[#allocation6 + $0x3e0] sm:$0xff]
    %v278 = vld [vmem:[#allocation6 + $0x3e8] sm:$0xff]
    %v279 = vld [vmem:[#allocation6 + $0x3f0] sm:$0xff]
    %v280 = vld [vmem:[#allocation6 + $0x3f8] sm:$0xff]
    %v282 = vunpack.c.l.b16 %v152
    %v283 = vunpack.c.h.b16 %v152
    %v284 = vpack.c.b16 %v282, %v282
    %v285 = vpack.c.b16 %v283, %v283
    %v416 = vunpack.c.l.b16 %v153
    %v417 = vunpack.c.h.b16 %v153
    %v418 = vunpack.c.l.b16 %v154
    %v419 = vunpack.c.h.b16 %v154
    %v420 = vunpack.c.l.b16 %v155
    %v421 = vunpack.c.h.b16 %v155
    %v422 = vunpack.c.l.b16 %v156
    %v423 = vunpack.c.h.b16 %v156
    %v424 = vunpack.c.l.b16 %v157
    %v425 = vunpack.c.h.b16 %v157
    %v426 = vunpack.c.l.b16 %v158
    %v427 = vunpack.c.h.b16 %v158
    %v428 = vunpack.c.l.b16 %v159
    %v429 = vunpack.c.h.b16 %v159
    %v430 = vunpack.c.l.b16 %v160
    %v431 = vunpack.c.h.b16 %v160
    %v432 = vunpack.c.l.b16 %v161
    %v433 = vunpack.c.h.b16 %v161
    %v434 = vunpack.c.l.b16 %v162
    %v435 = vunpack.c.h.b16 %v162
    %v436 = vunpack.c.l.b16 %v163
    %v437 = vunpack.c.h.b16 %v163
    %v438 = vunpack.c.l.b16 %v164
    %v439 = vunpack.c.h.b16 %v164
    %v440 = vunpack.c.l.b16 %v165
    %v441 = vunpack.c.h.b16 %v165
    %v442 = vunpack.c.l.b16 %v166
    %v443 = vunpack.c.h.b16 %v166
    %v444 = vunpack.c.l.b16 %v167
    %v445 = vunpack.c.h.b16 %v167
    %v446 = vunpack.c.l.b16 %v168
    %v447 = vunpack.c.h.b16 %v168
    %v448 = vunpack.c.l.b16 %v169
    %v449 = vunpack.c.h.b16 %v169
    %v450 = vunpack.c.l.b16 %v170
    %v451 = vunpack.c.h.b16 %v170
    %v452 = vunpack.c.l.b16 %v171
    %v453 = vunpack.c.h.b16 %v171
    %v454 = vunpack.c.l.b16 %v172
    %v455 = vunpack.c.h.b16 %v172
    %v456 = vunpack.c.l.b16 %v173
    %v457 = vunpack.c.h.b16 %v173
    %v458 = vunpack.c.l.b16 %v174
    %v459 = vunpack.c.h.b16 %v174
    %v460 = vunpack.c.l.b16 %v175
    %v461 = vunpack.c.h.b16 %v175
    %v462 = vunpack.c.l.b16 %v176
    %v463 = vunpack.c.h.b16 %v176
    %v464 = vunpack.c.l.b16 %v177
    %v465 = vunpack.c.h.b16 %v177
    %v466 = vunpack.c.l.b16 %v178
    %v467 = vunpack.c.h.b16 %v178
    %v468 = vunpack.c.l.b16 %v179
    %v469 = vunpack.c.h.b16 %v179
    %v470 = vunpack.c.l.b16 %v180
    %v471 = vunpack.c.h.b16 %v180
    %v472 = vunpack.c.l.b16 %v181
    %v473 = vunpack.c.h.b16 %v181
    %v474 = vunpack.c.l.b16 %v182
    %v475 = vunpack.c.h.b16 %v182
    %v476 = vunpack.c.l.b16 %v183
    %v477 = vunpack.c.h.b16 %v183
    %v478 = vunpack.c.l.b16 %v184
    %v479 = vunpack.c.h.b16 %v184
    %v480 = vunpack.c.l.b16 %v185
    %v481 = vunpack.c.h.b16 %v185
    %v482 = vunpack.c.l.b16 %v186
    %v483 = vunpack.c.h.b16 %v186
    %v484 = vunpack.c.l.b16 %v187
    %v485 = vunpack.c.h.b16 %v187
    %v486 = vunpack.c.l.b16 %v188
    %v487 = vunpack.c.h.b16 %v188
    %v488 = vunpack.c.l.b16 %v189
    %v489 = vunpack.c.h.b16 %v189
    %v490 = vunpack.c.l.b16 %v190
    %v491 = vunpack.c.h.b16 %v190
    %v492 = vunpack.c.l.b16 %v191
    %v493 = vunpack.c.h.b16 %v191
    %v494 = vunpack.c.l.b16 %v192
    %v495 = vunpack.c.h.b16 %v192
    %v496 = vunpack.c.l.b16 %v193
    %v497 = vunpack.c.h.b16 %v193
    %v498 = vunpack.c.l.b16 %v194
    %v499 = vunpack.c.h.b16 %v194
    %v500 = vunpack.c.l.b16 %v195
    %v501 = vunpack.c.h.b16 %v195
    %v502 = vunpack.c.l.b16 %v196
    %v503 = vunpack.c.h.b16 %v196
    %v504 = vunpack.c.l.b16 %v197
    %v505 = vunpack.c.h.b16 %v197
    %v506 = vunpack.c.l.b16 %v198
    %v507 = vunpack.c.h.b16 %v198
    %v508 = vunpack.c.l.b16 %v199
    %v509 = vunpack.c.h.b16 %v199
    %v510 = vunpack.c.l.b16 %v200
    %v511 = vunpack.c.h.b16 %v200
    %v512 = vunpack.c.l.b16 %v201
    %v513 = vunpack.c.h.b16 %v201
    %v514 = vunpack.c.l.b16 %v202
    %v515 = vunpack.c.h.b16 %v202
    %v516 = vunpack.c.l.b16 %v203
    %v517 = vunpack.c.h.b16 %v203
    %v518 = vunpack.c.l.b16 %v204
    %v519 = vunpack.c.h.b16 %v204
    %v520 = vunpack.c.l.b16 %v205
    %v521 = vunpack.c.h.b16 %v205
    %v522 = vunpack.c.l.b16 %v206
    %v523 = vunpack.c.h.b16 %v206
    %v524 = vunpack.c.l.b16 %v207
    %v525 = vunpack.c.h.b16 %v207
    %v526 = vunpack.c.l.b16 %v208
    %v527 = vunpack.c.h.b16 %v208
    %v528 = vunpack.c.l.b16 %v209
    %v529 = vunpack.c.h.b16 %v209
    %v530 = vunpack.c.l.b16 %v210
    %v531 = vunpack.c.h.b16 %v210
    %v532 = vunpack.c.l.b16 %v211
    %v533 = vunpack.c.h.b16 %v211
    %v534 = vunpack.c.l.b16 %v212
    %v535 = vunpack.c.h.b16 %v212
    %v536 = vunpack.c.l.b16 %v213
    %v537 = vunpack.c.h.b16 %v213
    %v538 = vunpack.c.l.b16 %v214
    %v539 = vunpack.c.h.b16 %v214
    %v540 = vunpack.c.l.b16 %v215
    %v541 = vunpack.c.h.b16 %v215
    %v542 = vunpack.c.l.b16 %v216
    %v543 = vunpack.c.h.b16 %v216
    %v544 = vunpack.c.l.b16 %v217
    %v545 = vunpack.c.h.b16 %v217
    %v546 = vunpack.c.l.b16 %v218
    %v547 = vunpack.c.h.b16 %v218
    %v548 = vunpack.c.l.b16 %v219
    %v549 = vunpack.c.h.b16 %v219
    %v550 = vunpack.c.l.b16 %v220
    %v551 = vunpack.c.h.b16 %v220
    %v552 = vunpack.c.l.b16 %v221
    %v553 = vunpack.c.h.b16 %v221
    %v554 = vunpack.c.l.b16 %v222
    %v555 = vunpack.c.h.b16 %v222
    %v556 = vunpack.c.l.b16 %v223
    %v557 = vunpack.c.h.b16 %v223
    %v558 = vunpack.c.l.b16 %v224
    %v559 = vunpack.c.h.b16 %v224
    %v560 = vunpack.c.l.b16 %v225
    %v561 = vunpack.c.h.b16 %v225
    %v562 = vunpack.c.l.b16 %v226
    %v563 = vunpack.c.h.b16 %v226
    %v564 = vunpack.c.l.b16 %v227
    %v565 = vunpack.c.h.b16 %v227
    %v566 = vunpack.c.l.b16 %v228
    %v567 = vunpack.c.h.b16 %v228
    %v568 = vunpack.c.l.b16 %v229
    %v569 = vunpack.c.h.b16 %v229
    %v570 = vunpack.c.l.b16 %v230
    %v571 = vunpack.c.h.b16 %v230
    %v572 = vunpack.c.l.b16 %v231
    %v573 = vunpack.c.h.b16 %v231
    %v574 = vunpack.c.l.b16 %v232
    %v575 = vunpack.c.h.b16 %v232
    %v576 = vunpack.c.l.b16 %v233
    %v577 = vunpack.c.h.b16 %v233
    %v578 = vunpack.c.l.b16 %v234
    %v579 = vunpack.c.h.b16 %v234
    %v580 = vunpack.c.l.b16 %v235
    %v581 = vunpack.c.h.b16 %v235
    %v582 = vunpack.c.l.b16 %v236
    %v583 = vunpack.c.h.b16 %v236
    %v584 = vunpack.c.l.b16 %v237
    %v585 = vunpack.c.h.b16 %v237
    %v586 = vunpack.c.l.b16 %v238
    %v587 = vunpack.c.h.b16 %v238
    %v588 = vunpack.c.l.b16 %v239
    %v589 = vunpack.c.h.b16 %v239
    %v590 = vunpack.c.l.b16 %v240
    %v591 = vunpack.c.h.b16 %v240
    %v592 = vunpack.c.l.b16 %v241
    %v593 = vunpack.c.h.b16 %v241
    %v594 = vunpack.c.l.b16 %v242
    %v595 = vunpack.c.h.b16 %v242
    %v596 = vunpack.c.l.b16 %v243
    %v597 = vunpack.c.h.b16 %v243
    %v598 = vunpack.c.l.b16 %v244
    %v599 = vunpack.c.h.b16 %v244
    %v600 = vunpack.c.l.b16 %v245
    %v601 = vunpack.c.h.b16 %v245
    %v602 = vunpack.c.l.b16 %v246
    %v603 = vunpack.c.h.b16 %v246
    %v604 = vunpack.c.l.b16 %v247
    %v605 = vunpack.c.h.b16 %v247
    %v606 = vunpack.c.l.b16 %v248
    %v607 = vunpack.c.h.b16 %v248
    %v608 = vunpack.c.l.b16 %v249
    %v609 = vunpack.c.h.b16 %v249
    %v610 = vunpack.c.l.b16 %v250
    %v611 = vunpack.c.h.b16 %v250
    %v612 = vunpack.c.l.b16 %v251
    %v613 = vunpack.c.h.b16 %v251
    %v614 = vunpack.c.l.b16 %v252
    %v615 = vunpack.c.h.b16 %v252
    %v616 = vunpack.c.l.b16 %v253
    %v617 = vunpack.c.h.b16 %v253
    %v618 = vunpack.c.l.b16 %v254
    %v619 = vunpack.c.h.b16 %v254
    %v620 = vunpack.c.l.b16 %v255
    %v621 = vunpack.c.h.b16 %v255
    %v622 = vunpack.c.l.b16 %v256
    %v623 = vunpack.c.h.b16 %v256
    %v624 = vunpack.c.l.b16 %v257
    %v625 = vunpack.c.h.b16 %v257
    %v626 = vunpack.c.l.b16 %v258
    %v627 = vunpack.c.h.b16 %v258
    %v628 = vunpack.c.l.b16 %v259
    %v629 = vunpack.c.h.b16 %v259
    %v630 = vunpack.c.l.b16 %v260
    %v631 = vunpack.c.h.b16 %v260
    %v632 = vunpack.c.l.b16 %v261
    %v633 = vunpack.c.h.b16 %v261
    %v634 = vunpack.c.l.b16 %v262
    %v635 = vunpack.c.h.b16 %v262
    %v636 = vunpack.c.l.b16 %v263
    %v637 = vunpack.c.h.b16 %v263
    %v638 = vunpack.c.l.b16 %v264
    %v639 = vunpack.c.h.b16 %v264
    %v640 = vunpack.c.l.b16 %v265
    %v641 = vunpack.c.h.b16 %v265
    %v642 = vunpack.c.l.b16 %v266
    %v643 = vunpack.c.h.b16 %v266
    %v644 = vunpack.c.l.b16 %v267
    %v645 = vunpack.c.h.b16 %v267
    %v646 = vunpack.c.l.b16 %v268
    %v647 = vunpack.c.h.b16 %v268
    %v648 = vunpack.c.l.b16 %v269
    %v649 = vunpack.c.h.b16 %v269
    %v650 = vunpack.c.l.b16 %v270
    %v651 = vunpack.c.h.b16 %v270
    %v652 = vunpack.c.l.b16 %v271
    %v653 = vunpack.c.h.b16 %v271
    %v654 = vunpack.c.l.b16 %v272
    %v655 = vunpack.c.h.b16 %v272
    %v656 = vunpack.c.l.b16 %v273
    %v657 = vunpack.c.h.b16 %v273
    %v658 = vunpack.c.l.b16 %v274
    %v659 = vunpack.c.h.b16 %v274
    %v660 = vunpack.c.l.b16 %v275
    %v661 = vunpack.c.h.b16 %v275
    %v662 = vunpack.c.l.b16 %v276
    %v663 = vunpack.c.h.b16 %v276
    %v664 = vunpack.c.l.b16 %v277
    %v665 = vunpack.c.h.b16 %v277
    %v666 = vunpack.c.l.b16 %v278
    %v667 = vunpack.c.h.b16 %v278
    %v668 = vunpack.c.l.b16 %v279
    %v669 = vunpack.c.h.b16 %v279
    %v670 = vunpack.c.l.b16 %v280
    %v671 = vunpack.c.h.b16 %v280
    %v672 = vpack.c.b16 %v424, %v416
    %v673 = vpack.c.b16 %v425, %v417
    %v674 = vpack.c.b16 %v426, %v418
    %v675 = vpack.c.b16 %v427, %v419
    %v676 = vpack.c.b16 %v428, %v420
    %v677 = vpack.c.b16 %v429, %v421
    %v678 = vpack.c.b16 %v430, %v422
    %v679 = vpack.c.b16 %v431, %v423
    %v680 = vpack.c.b16 %v440, %v432
    %v681 = vpack.c.b16 %v441, %v433
    %v682 = vpack.c.b16 %v442, %v434
    %v683 = vpack.c.b16 %v443, %v435
    %v684 = vpack.c.b16 %v444, %v436
    %v685 = vpack.c.b16 %v445, %v437
    %v686 = vpack.c.b16 %v446, %v438
    %v687 = vpack.c.b16 %v447, %v439
    %v688 = vpack.c.b16 %v456, %v448
    %v689 = vpack.c.b16 %v457, %v449
    %v690 = vpack.c.b16 %v458, %v450
    %v691 = vpack.c.b16 %v459, %v451
    %v692 = vpack.c.b16 %v460, %v452
    %v693 = vpack.c.b16 %v461, %v453
    %v694 = vpack.c.b16 %v462, %v454
    %v695 = vpack.c.b16 %v463, %v455
    %v696 = vpack.c.b16 %v472, %v464
    %v697 = vpack.c.b16 %v473, %v465
    %v698 = vpack.c.b16 %v474, %v466
    %v699 = vpack.c.b16 %v475, %v467
    %v700 = vpack.c.b16 %v476, %v468
    %v701 = vpack.c.b16 %v477, %v469
    %v702 = vpack.c.b16 %v478, %v470
    %v703 = vpack.c.b16 %v479, %v471
    %v704 = vpack.c.b16 %v488, %v480
    %v705 = vpack.c.b16 %v489, %v481
    %v706 = vpack.c.b16 %v490, %v482
    %v707 = vpack.c.b16 %v491, %v483
    %v708 = vpack.c.b16 %v492, %v484
    %v709 = vpack.c.b16 %v493, %v485
    %v710 = vpack.c.b16 %v494, %v486
    %v711 = vpack.c.b16 %v495, %v487
    %v712 = vpack.c.b16 %v504, %v496
    %v713 = vpack.c.b16 %v505, %v497
    %v714 = vpack.c.b16 %v506, %v498
    %v715 = vpack.c.b16 %v507, %v499
    %v716 = vpack.c.b16 %v508, %v500
    %v717 = vpack.c.b16 %v509, %v501
    %v718 = vpack.c.b16 %v510, %v502
    %v719 = vpack.c.b16 %v511, %v503
    %v720 = vpack.c.b16 %v520, %v512
    %v721 = vpack.c.b16 %v521, %v513
    %v722 = vpack.c.b16 %v522, %v514
    %v723 = vpack.c.b16 %v523, %v515
    %v724 = vpack.c.b16 %v524, %v516
    %v725 = vpack.c.b16 %v525, %v517
    %v726 = vpack.c.b16 %v526, %v518
    %v727 = vpack.c.b16 %v527, %v519
    %v728 = vpack.c.b16 %v536, %v528
    %v729 = vpack.c.b16 %v537, %v529
    %v730 = vpack.c.b16 %v538, %v530
    %v731 = vpack.c.b16 %v539, %v531
    %v732 = vpack.c.b16 %v540, %v532
    %v733 = vpack.c.b16 %v541, %v533
    %v734 = vpack.c.b16 %v542, %v534
    %v735 = vpack.c.b16 %v543, %v535
    %v736 = vpack.c.b16 %v552, %v544
    %v737 = vpack.c.b16 %v553, %v545
    %v738 = vpack.c.b16 %v554, %v546
    %v739 = vpack.c.b16 %v555, %v547
    %v740 = vpack.c.b16 %v556, %v548
    %v741 = vpack.c.b16 %v557, %v549
    %v742 = vpack.c.b16 %v558, %v550
    %v743 = vpack.c.b16 %v559, %v551
    %v744 = vpack.c.b16 %v568, %v560
    %v745 = vpack.c.b16 %v569, %v561
    %v746 = vpack.c.b16 %v570, %v562
    %v747 = vpack.c.b16 %v571, %v563
    %v748 = vpack.c.b16 %v572, %v564
    %v749 = vpack.c.b16 %v573, %v565
    %v750 = vpack.c.b16 %v574, %v566
    %v751 = vpack.c.b16 %v575, %v567
    %v752 = vpack.c.b16 %v584, %v576
    %v753 = vpack.c.b16 %v585, %v577
    %v754 = vpack.c.b16 %v586, %v578
    %v755 = vpack.c.b16 %v587, %v579
    %v756 = vpack.c.b16 %v588, %v580
    %v757 = vpack.c.b16 %v589, %v581
    %v758 = vpack.c.b16 %v590, %v582
    %v759 = vpack.c.b16 %v591, %v583
    %v760 = vpack.c.b16 %v600, %v592
    %v761 = vpack.c.b16 %v601, %v593
    %v762 = vpack.c.b16 %v602, %v594
    %v763 = vpack.c.b16 %v603, %v595
    %v764 = vpack.c.b16 %v604, %v596
    %v765 = vpack.c.b16 %v605, %v597
    %v766 = vpack.c.b16 %v606, %v598
    %v767 = vpack.c.b16 %v607, %v599
    %v768 = vpack.c.b16 %v616, %v608
    %v769 = vpack.c.b16 %v617, %v609
    %v770 = vpack.c.b16 %v618, %v610
    %v771 = vpack.c.b16 %v619, %v611
    %v772 = vpack.c.b16 %v620, %v612
    %v773 = vpack.c.b16 %v621, %v613
    %v774 = vpack.c.b16 %v622, %v614
    %v775 = vpack.c.b16 %v623, %v615
    %v776 = vpack.c.b16 %v632, %v624
    %v777 = vpack.c.b16 %v633, %v625
    %v778 = vpack.c.b16 %v634, %v626
    %v779 = vpack.c.b16 %v635, %v627
    %v780 = vpack.c.b16 %v636, %v628
    %v781 = vpack.c.b16 %v637, %v629
    %v782 = vpack.c.b16 %v638, %v630
    %v783 = vpack.c.b16 %v639, %v631
    %v784 = vpack.c.b16 %v648, %v640
    %v785 = vpack.c.b16 %v649, %v641
    %v786 = vpack.c.b16 %v650, %v642
    %v787 = vpack.c.b16 %v651, %v643
    %v788 = vpack.c.b16 %v652, %v644
    %v789 = vpack.c.b16 %v653, %v645
    %v790 = vpack.c.b16 %v654, %v646
    %v791 = vpack.c.b16 %v655, %v647
    %v792 = vpack.c.b16 %v664, %v656
    %v793 = vpack.c.b16 %v665, %v657
    %v794 = vpack.c.b16 %v666, %v658
    %v795 = vpack.c.b16 %v667, %v659
    %v796 = vpack.c.b16 %v668, %v660
    %v797 = vpack.c.b16 %v669, %v661
    %v798 = vpack.c.b16 %v670, %v662
    %v799 = vpack.c.b16 %v671, %v663
    %928 = vmatprep.subr.bf16.mxu0 %v729
    %929 = vmatpush1.bf16.msra.mxu0 %v728
    %930 = vmatprep.subr.bf16.mxu0 %v721
    %931 = vmatpush1.bf16.msra.mxu0 %v720
    %932 = vmatprep.subr.bf16.mxu0 %v713
    %933 = vmatpush1.bf16.msra.mxu0 %v712
    %934 = vmatprep.subr.bf16.mxu0 %v705
    %935 = vmatpush1.bf16.msra.mxu0 %v704
    %936 = vmatprep.subr.bf16.mxu0 %v697
    %937 = vmatpush1.bf16.msra.mxu0 %v696
    %938 = vmatprep.subr.bf16.mxu0 %v689
    %939 = vmatpush1.bf16.msra.mxu0 %v688
    %940 = vmatprep.subr.bf16.mxu0 %v681
    %941 = vmatpush1.bf16.msra.mxu0 %v680
    %942 = vmatprep.subr.bf16.mxu0 %v673
    %943 = vmatpush1.bf16.msra.mxu0 %v672
    %944 = vmatprep.subr.bf16.mxu0 %v793
    %945 = vmatpush2.bf16.msra.mxu0 %v792
    %946 = vmatprep.subr.bf16.mxu0 %v785
    %947 = vmatpush2.bf16.msra.mxu0 %v784
    %948 = vmatprep.subr.bf16.mxu0 %v777
    %949 = vmatpush2.bf16.msra.mxu0 %v776
    %950 = vmatprep.subr.bf16.mxu0 %v769
    %951 = vmatpush2.bf16.msra.mxu0 %v768
    %952 = vmatprep.subr.bf16.mxu0 %v761
    %953 = vmatpush2.bf16.msra.mxu0 %v760
    %954 = vmatprep.subr.bf16.mxu0 %v753
    %955 = vmatpush2.bf16.msra.mxu0 %v752
    %956 = vmatprep.subr.bf16.mxu0 %v745
    %957 = vmatpush2.bf16.msra.mxu0 %v744
    %958 = vmatprep.subr.bf16.mxu0 %v737
    %959 = vmatpush2.bf16.msra.mxu0 %v736
    %960 = vmatprep.mubr.bf16.mxu0 %v285
    %961 = vmatmul.mubr.bf16.gmra.mxu0 %v284
    %v962 = vpop.f32.mrf.mxu0
    %v963 = vadd.f32 0.0, %v962
    %v964 = vpop.f32.mrf.mxu0
    %v965 = vadd.f32 0.0, %v964
    %v966 = vpop.f32.mrf.mxu0
    %v967 = vpop.f32.mrf.mxu0
    %968 = vdwg.mxu0
    %969 = vmatprep.subr.bf16.mxu0 %v731
    %970 = vmatpush1.bf16.msra.mxu0 %v730
    %971 = vmatprep.subr.bf16.mxu0 %v723
    %972 = vmatpush1.bf16.msra.mxu0 %v722
    %973 = vmatprep.subr.bf16.mxu0 %v715
    %974 = vmatpush1.bf16.msra.mxu0 %v714
    %975 = vmatprep.subr.bf16.mxu0 %v707
    %976 = vmatpush1.bf16.msra.mxu0 %v706
    %977 = vmatprep.subr.bf16.mxu0 %v699
    %978 = vmatpush1.bf16.msra.mxu0 %v698
    %979 = vmatprep.subr.bf16.mxu0 %v691
    %980 = vmatpush1.bf16.msra.mxu0 %v690
    %981 = vmatprep.subr.bf16.mxu0 %v683
    %982 = vmatpush1.bf16.msra.mxu0 %v682
    %983 = vmatprep.subr.bf16.mxu0 %v675
    %984 = vmatpush1.bf16.msra.mxu0 %v674
    %985 = vmatprep.subr.bf16.mxu0 %v795
    %986 = vmatpush2.bf16.msra.mxu0 %v794
    %987 = vmatprep.subr.bf16.mxu0 %v787
    %988 = vmatpush2.bf16.msra.mxu0 %v786
    %989 = vmatprep.subr.bf16.mxu0 %v779
    %990 = vmatpush2.bf16.msra.mxu0 %v778
    %991 = vmatprep.subr.bf16.mxu0 %v771
    %992 = vmatpush2.bf16.msra.mxu0 %v770
    %993 = vmatprep.subr.bf16.mxu0 %v763
    %994 = vmatpush2.bf16.msra.mxu0 %v762
    %995 = vmatprep.subr.bf16.mxu0 %v755
    %996 = vmatpush2.bf16.msra.mxu0 %v754
    %997 = vmatprep.subr.bf16.mxu0 %v747
    %998 = vmatpush2.bf16.msra.mxu0 %v746
    %999 = vmatprep.subr.bf16.mxu0 %v739
    %1000 = vmatpush2.bf16.msra.mxu0 %v738
    %1001 = vmatprep.mubr.bf16.mxu0 %v285
    %1002 = vmatmul.mubr.bf16.gmra.mxu0 %v284
    %v1003 = vpop.f32.mrf.mxu0
    %v1004 = vadd.f32 0.0, %v1003
    %v1005 = vpop.f32.mrf.mxu0
    %v1006 = vadd.f32 0.0, %v1005
    %v1007 = vpop.f32.mrf.mxu0
    %v1008 = vpop.f32.mrf.mxu0
    %1009 = vdwg.mxu0
    %1010 = vmatprep.subr.bf16.mxu0 %v733
    %1011 = vmatpush1.bf16.msra.mxu0 %v732
    %1012 = vmatprep.subr.bf16.mxu0 %v725
    %1013 = vmatpush1.bf16.msra.mxu0 %v724
    %1014 = vmatprep.subr.bf16.mxu0 %v717
    %1015 = vmatpush1.bf16.msra.mxu0 %v716
    %1016 = vmatprep.subr.bf16.mxu0 %v709
    %1017 = vmatpush1.bf16.msra.mxu0 %v708
    %1018 = vmatprep.subr.bf16.mxu0 %v701
    %1019 = vmatpush1.bf16.msra.mxu0 %v700
    %1020 = vmatprep.subr.bf16.mxu0 %v693
    %1021 = vmatpush1.bf16.msra.mxu0 %v692
    %1022 = vmatprep.subr.bf16.mxu0 %v685
    %1023 = vmatpush1.bf16.msra.mxu0 %v684
    %1024 = vmatprep.subr.bf16.mxu0 %v677
    %1025 = vmatpush1.bf16.msra.mxu0 %v676
    %1026 = vmatprep.subr.bf16.mxu0 %v797
    %1027 = vmatpush2.bf16.msra.mxu0 %v796
    %1028 = vmatprep.subr.bf16.mxu0 %v789
    %1029 = vmatpush2.bf16.msra.mxu0 %v788
    %1030 = vmatprep.subr.bf16.mxu0 %v781
    %1031 = vmatpush2.bf16.msra.mxu0 %v780
    %1032 = vmatprep.subr.bf16.mxu0 %v773
    %1033 = vmatpush2.bf16.msra.mxu0 %v772
    %1034 = vmatprep.subr.bf16.mxu0 %v765
    %1035 = vmatpush2.bf16.msra.mxu0 %v764
    %1036 = vmatprep.subr.bf16.mxu0 %v757
    %1037 = vmatpush2.bf16.msra.mxu0 %v756
    %1038 = vmatprep.subr.bf16.mxu0 %v749
    %1039 = vmatpush2.bf16.msra.mxu0 %v748
    %1040 = vmatprep.subr.bf16.mxu0 %v741
    %1041 = vmatpush2.bf16.msra.mxu0 %v740
    %1042 = vmatprep.mubr.bf16.mxu0 %v285
    %1043 = vmatmul.mubr.bf16.gmra.mxu0 %v284
    %v1044 = vpop.f32.mrf.mxu0
    %v1045 = vadd.f32 0.0, %v1044
    %v1046 = vpop.f32.mrf.mxu0
    %v1047 = vadd.f32 0.0, %v1046
    %v1048 = vpop.f32.mrf.mxu0
    %v1049 = vpop.f32.mrf.mxu0
    %1050 = vdwg.mxu0
    %1051 = vmatprep.subr.bf16.mxu0 %v735
    %1052 = vmatpush1.bf16.msra.mxu0 %v734
    %1053 = vmatprep.subr.bf16.mxu0 %v727
    %1054 = vmatpush1.bf16.msra.mxu0 %v726
    %1055 = vmatprep.subr.bf16.mxu0 %v719
    %1056 = vmatpush1.bf16.msra.mxu0 %v718
    %1057 = vmatprep.subr.bf16.mxu0 %v711
    %1058 = vmatpush1.bf16.msra.mxu0 %v710
    %1059 = vmatprep.subr.bf16.mxu0 %v703
    %1060 = vmatpush1.bf16.msra.mxu0 %v702
    %1061 = vmatprep.subr.bf16.mxu0 %v695
    %1062 = vmatpush1.bf16.msra.mxu0 %v694
    %1063 = vmatprep.subr.bf16.mxu0 %v687
    %1064 = vmatpush1.bf16.msra.mxu0 %v686
    %1065 = vmatprep.subr.bf16.mxu0 %v679
    %1066 = vmatpush1.bf16.msra.mxu0 %v678
    %1067 = vmatprep.subr.bf16.mxu0 %v799
    %1068 = vmatpush2.bf16.msra.mxu0 %v798
    %1069 = vmatprep.subr.bf16.mxu0 %v791
    %1070 = vmatpush2.bf16.msra.mxu0 %v790
    %1071 = vmatprep.subr.bf16.mxu0 %v783
    %1072 = vmatpush2.bf16.msra.mxu0 %v782
    %1073 = vmatprep.subr.bf16.mxu0 %v775
    %1074 = vmatpush2.bf16.msra.mxu0 %v774
    %1075 = vmatprep.subr.bf16.mxu0 %v767
    %1076 = vmatpush2.bf16.msra.mxu0 %v766
    %1077 = vmatprep.subr.bf16.mxu0 %v759
    %1078 = vmatpush2.bf16.msra.mxu0 %v758
    %1079 = vmatprep.subr.bf16.mxu0 %v751
    %1080 = vmatpush2.bf16.msra.mxu0 %v750
    %1081 = vmatprep.subr.bf16.mxu0 %v743
    %1082 = vmatpush2.bf16.msra.mxu0 %v742
    %1083 = vmatprep.mubr.bf16.mxu0 %v285
    %1084 = vmatmul.mubr.bf16.gmra.mxu0 %v284
    %v1085 = vpop.f32.mrf.mxu0
    %v1086 = vadd.f32 0.0, %v1085
    %v1087 = vpop.f32.mrf.mxu0
    %v1088 = vadd.f32 0.0, %v1087
    %v1089 = vpop.f32.mrf.mxu0
    %v1090 = vpop.f32.mrf.mxu0
    %1091 = vdwg.mxu0
    %v1092 = vadd.f32 %v144, %v963
    %v1093 = vadd.f32 %v145, %v965
    %v1094 = vadd.f32 %v146, %v1004
    %v1095 = vadd.f32 %v147, %v1006
    %v1096 = vadd.f32 %v148, %v1045
    %v1097 = vadd.f32 %v149, %v1047
    %v1098 = vadd.f32 %v150, %v1086
    %v1099 = vadd.f32 %v151, %v1088
    %1100 = vst [vmem:[#allocation2] sm:$0xff] %v1092
    %1101 = vst [vmem:[#allocation2 + $0x8] sm:$0xff] %v1093
    %1102 = vst [vmem:[#allocation2 + $0x10] sm:$0xff] %v1094
    %1103 = vst [vmem:[#allocation2 + $0x18] sm:$0xff] %v1095
    %1104 = vst [vmem:[#allocation2 + $0x20] sm:$0xff] %v1096
    %1105 = vst [vmem:[#allocation2 + $0x28] sm:$0xff] %v1097
    %1106 = vst [vmem:[#allocation2 + $0x30] sm:$0xff] %v1098
    %1107 = vst [vmem:[#allocation2 + $0x38] sm:$0xff] %v1099
    // Predicated region
    $region82: #{tpu_custom_call.1} parent=1 // pred_check
      %p1108 = pneg %p132
    $region83: #{tpu_custom_call.1} parent=1 // pred_check_branch
      %1110 = sbr.rel (%p1108) target = $region85
    $region84: #{tpu_custom_call.1} parent=1 // pred_region
      %v1111 = vld [vmem:[#allocation2] sm:$0xff]
      %v1112 = vld [vmem:[#allocation2 + $0x8] sm:$0xff]
      %v1113 = vld [vmem:[#allocation2 + $0x10] sm:$0xff]
      %v1114 = vld [vmem:[#allocation2 + $0x18] sm:$0xff]
      %v1115 = vld [vmem:[#allocation2 + $0x20] sm:$0xff]
      %v1116 = vld [vmem:[#allocation2 + $0x28] sm:$0xff]
      %v1117 = vld [vmem:[#allocation2 + $0x30] sm:$0xff]
      %v1118 = vld [vmem:[#allocation2 + $0x38] sm:$0xff]
      %v1119 = vld [vmem:[#allocation8] sm:$0xff]
      %v1121 = vlaneseq
      %v1122 = vshrl.u32 %v1121, 7
      %v1123 = vsub.s32 0, %v1122
      %v1124 = vrot.slane %v1119, %v1123
      %v1125 = vlaneseq
      %v1126 = vshrl.u32 %v1125, 7
      %v1127 = vsub.s32 1, %v1126
      %v1128 = vrot.slane %v1119, %v1127
      %v1129 = vlaneseq
      %v1130 = vshrl.u32 %v1129, 7
      %v1131 = vsub.s32 2, %v1130
      %v1132 = vrot.slane %v1119, %v1131
      %v1133 = vlaneseq
      %v1134 = vshrl.u32 %v1133, 7
      %v1135 = vsub.s32 3, %v1134
      %v1136 = vrot.slane %v1119, %v1135
      %v1137 = vlaneseq
      %v1138 = vshrl.u32 %v1137, 7
      %v1139 = vsub.s32 4, %v1138
      %v1140 = vrot.slane %v1119, %v1139
      %v1141 = vlaneseq
      %v1142 = vshrl.u32 %v1141, 7
      %v1143 = vsub.s32 5, %v1142
      %v1144 = vrot.slane %v1119, %v1143
      %v1145 = vlaneseq
      %v1146 = vshrl.u32 %v1145, 7
      %v1147 = vsub.s32 6, %v1146
      %v1148 = vrot.slane %v1119, %v1147
      %v1149 = vlaneseq
      %v1150 = vshrl.u32 %v1149, 7
      %v1151 = vsub.s32 7, %v1150
      %v1152 = vrot.slane %v1119, %v1151
      %v1161 = vmul.f32 %v1111, %v1124
      %v1162 = vmul.f32 %v1112, %v1128
      %v1163 = vmul.f32 %v1113, %v1132
      %v1164 = vmul.f32 %v1114, %v1136
      %v1165 = vmul.f32 %v1115, %v1140
      %v1166 = vmul.f32 %v1116, %v1144
      %v1167 = vmul.f32 %v1117, %v1148
      %v1168 = vmul.f32 %v1118, %v1152
      %v1169 = vld [vmem:[#allocation9] sm:$0xff]
      %v1171 = vlaneseq
      %v1172 = vshrl.u32 %v1171, 7
      %v1173 = vsub.s32 0, %v1172
      %v1174 = vrot.slane %v1169, %v1173
      %v1175 = vlaneseq
      %v1176 = vshrl.u32 %v1175, 7
      %v1177 = vsub.s32 1, %v1176
      %v1178 = vrot.slane %v1169, %v1177
      %v1179 = vlaneseq
      %v1180 = vshrl.u32 %v1179, 7
      %v1181 = vsub.s32 2, %v1180
      %v1182 = vrot.slane %v1169, %v1181
      %v1183 = vlaneseq
      %v1184 = vshrl.u32 %v1183, 7
      %v1185 = vsub.s32 3, %v1184
      %v1186 = vrot.slane %v1169, %v1185
      %v1187 = vlaneseq
      %v1188 = vshrl.u32 %v1187, 7
      %v1189 = vsub.s32 4, %v1188
      %v1190 = vrot.slane %v1169, %v1189
      %v1191 = vlaneseq
      %v1192 = vshrl.u32 %v1191, 7
      %v1193 = vsub.s32 5, %v1192
      %v1194 = vrot.slane %v1169, %v1193
      %v1195 = vlaneseq
      %v1196 = vshrl.u32 %v1195, 7
      %v1197 = vsub.s32 6, %v1196
      %v1198 = vrot.slane %v1169, %v1197
      %v1199 = vlaneseq
      %v1200 = vshrl.u32 %v1199, 7
      %v1201 = vsub.s32 7, %v1200
      %v1202 = vrot.slane %v1169, %v1201
      %v1211 = vadd.f32 %v1161, %v1174
      %v1212 = vadd.f32 %v1162, %v1178
      %v1213 = vadd.f32 %v1163, %v1182
      %v1214 = vadd.f32 %v1164, %v1186
      %v1215 = vadd.f32 %v1165, %v1190
      %v1216 = vadd.f32 %v1166, %v1194
      %v1217 = vadd.f32 %v1167, %v1198
      %v1218 = vadd.f32 %v1168, %v1202
      %vm1219 = vcmp.ge.f32.partialorder %v1211, 0.0
      %vm1220 = vcmp.ge.f32.partialorder %v1212, 0.0
      %vm1221 = vcmp.ge.f32.partialorder %v1213, 0.0
      %vm1222 = vcmp.ge.f32.partialorder %v1214, 0.0
      %vm1223 = vcmp.ge.f32.partialorder %v1215, 0.0
      %vm1224 = vcmp.ge.f32.partialorder %v1216, 0.0
      %vm1225 = vcmp.ge.f32.partialorder %v1217, 0.0
      %vm1226 = vcmp.ge.f32.partialorder %v1218, 0.0
      %v1227 = vmul.f32 %v1211, 0.01
      %v1228 = vmul.f32 %v1212, 0.01
      %v1229 = vmul.f32 %v1213, 0.01
      %v1230 = vmul.f32 %v1214, 0.01
      %v1231 = vmul.f32 %v1215, 0.01
      %v1232 = vmul.f32 %v1216, 0.01
      %v1233 = vmul.f32 %v1217, 0.01
      %v1234 = vmul.f32 %v1218, 0.01
      %v1235 = vsel %vm1219, %v1211, %v1227
      %v1236 = vsel %vm1220, %v1212, %v1228
      %v1237 = vsel %vm1221, %v1213, %v1229
      %v1238 = vsel %vm1222, %v1214, %v1230
      %v1239 = vsel %vm1223, %v1215, %v1231
      %v1240 = vsel %vm1224, %v1216, %v1232
      %v1241 = vsel %vm1225, %v1217, %v1233
      %v1242 = vsel %vm1226, %v1218, %v1234
      %v1243 = vpack.c.bf16 %v1235, %v1235
      %v1244 = vpack.c.bf16 %v1236, %v1236
      %v1245 = vpack.c.bf16 %v1237, %v1237
      %v1246 = vpack.c.bf16 %v1238, %v1238
      %v1247 = vpack.c.bf16 %v1239, %v1239
      %v1248 = vpack.c.bf16 %v1240, %v1240
      %v1249 = vpack.c.bf16 %v1241, %v1241
      %v1250 = vpack.c.bf16 %v1242, %v1242
      %v1251 = vld [vmem:[#allocation11] sm:$0xff]
      %v1252 = vld [vmem:[#allocation11 + $0x8] sm:$0xff]
      %v1253 = vld [vmem:[#allocation11 + $0x10] sm:$0xff]
      %v1254 = vld [vmem:[#allocation11 + $0x18] sm:$0xff]
      %v1255 = vld [vmem:[#allocation11 + $0x20] sm:$0xff]
      %v1256 = vld [vmem:[#allocation11 + $0x28] sm:$0xff]
      %v1257 = vld [vmem:[#allocation11 + $0x30] sm:$0xff]
      %v1258 = vld [vmem:[#allocation11 + $0x38] sm:$0xff]
      %v1259 = vld [vmem:[#allocation11 + $0x40] sm:$0xff]
      %v1260 = vld [vmem:[#allocation11 + $0x48] sm:$0xff]
      %v1261 = vld [vmem:[#allocation11 + $0x50] sm:$0xff]
      %v1262 = vld [vmem:[#allocation11 + $0x58] sm:$0xff]
      %v1263 = vld [vmem:[#allocation11 + $0x60] sm:$0xff]
      %v1264 = vld [vmem:[#allocation11 + $0x68] sm:$0xff]
      %v1265 = vld [vmem:[#allocation11 + $0x70] sm:$0xff]
      %v1266 = vld [vmem:[#allocation11 + $0x78] sm:$0xff]
      %v1267 = vld [vmem:[#allocation11 + $0x80] sm:$0xff]
      %v1268 = vld [vmem:[#allocation11 + $0x88] sm:$0xff]
      %v1269 = vld [vmem:[#allocation11 + $0x90] sm:$0xff]
      %v1270 = vld [vmem:[#allocation11 + $0x98] sm:$0xff]
      %v1271 = vld [vmem:[#allocation11 + $0xa0] sm:$0xff]
      %v1272 = vld [vmem:[#allocation11 + $0xa8] sm:$0xff]
      %v1273 = vld [vmem:[#allocation11 + $0xb0] sm:$0xff]
      %v1274 = vld [vmem:[#allocation11 + $0xb8] sm:$0xff]
      %v1275 = vld [vmem:[#allocation11 + $0xc0] sm:$0xff]
      %v1276 = vld [vmem:[#allocation11 + $0xc8] sm:$0xff]
      %v1277 = vld [vmem:[#allocation11 + $0xd0] sm:$0xff]
      %v1278 = vld [vmem:[#allocation11 + $0xd8] sm:$0xff]
      %v1279 = vld [vmem:[#allocation11 + $0xe0] sm:$0xff]
      %v1280 = vld [vmem:[#allocation11 + $0xe8] sm:$0xff]
      %v1281 = vld [vmem:[#allocation11 + $0xf0] sm:$0xff]
      %v1282 = vld [vmem:[#allocation11 + $0xf8] sm:$0xff]
      %v1283 = vld [vmem:[#allocation11 + $0x100] sm:$0xff]
      %v1284 = vld [vmem:[#allocation11 + $0x108] sm:$0xff]
      %v1285 = vld [vmem:[#allocation11 + $0x110] sm:$0xff]
      %v1286 = vld [vmem:[#allocation11 + $0x118] sm:$0xff]
      %v1287 = vld [vmem:[#allocation11 + $0x120] sm:$0xff]
      %v1288 = vld [vmem:[#allocation11 + $0x128] sm:$0xff]
      %v1289 = vld [vmem:[#allocation11 + $0x130] sm:$0xff]
      %v1290 = vld [vmem:[#allocation11 + $0x138] sm:$0xff]
      %v1291 = vld [vmem:[#allocation11 + $0x140] sm:$0xff]
      %v1292 = vld [vmem:[#allocation11 + $0x148] sm:$0xff]
      %v1293 = vld [vmem:[#allocation11 + $0x150] sm:$0xff]
      %v1294 = vld [vmem:[#allocation11 + $0x158] sm:$0xff]
      %v1295 = vld [vmem:[#allocation11 + $0x160] sm:$0xff]
      %v1296 = vld [vmem:[#allocation11 + $0x168] sm:$0xff]
      %v1297 = vld [vmem:[#allocation11 + $0x170] sm:$0xff]
      %v1298 = vld [vmem:[#allocation11 + $0x178] sm:$0xff]
      %v1299 = vld [vmem:[#allocation11 + $0x180] sm:$0xff]
      %v1300 = vld [vmem:[#allocation11 + $0x188] sm:$0xff]
      %v1301 = vld [vmem:[#allocation11 + $0x190] sm:$0xff]
      %v1302 = vld [vmem:[#allocation11 + $0x198] sm:$0xff]
      %v1303 = vld [vmem:[#allocation11 + $0x1a0] sm:$0xff]
      %v1304 = vld [vmem:[#allocation11 + $0x1a8] sm:$0xff]
      %v1305 = vld [vmem:[#allocation11 + $0x1b0] sm:$0xff]
      %v1306 = vld [vmem:[#allocation11 + $0x1b8] sm:$0xff]
      %v1307 = vld [vmem:[#allocation11 + $0x1c0] sm:$0xff]
      %v1308 = vld [vmem:[#allocation11 + $0x1c8] sm:$0xff]
      %v1309 = vld [vmem:[#allocation11 + $0x1d0] sm:$0xff]
      %v1310 = vld [vmem:[#allocation11 + $0x1d8] sm:$0xff]
      %v1311 = vld [vmem:[#allocation11 + $0x1e0] sm:$0xff]
      %v1312 = vld [vmem:[#allocation11 + $0x1e8] sm:$0xff]
      %v1313 = vld [vmem:[#allocation11 + $0x1f0] sm:$0xff]
      %v1314 = vld [vmem:[#allocation11 + $0x1f8] sm:$0xff]
      %v1315 = vld [vmem:[#allocation11 + $0x200] sm:$0xff]
      %v1316 = vld [vmem:[#allocation11 + $0x208] sm:$0xff]
      %v1317 = vld [vmem:[#allocation11 + $0x210] sm:$0xff]
      %v1318 = vld [vmem:[#allocation11 + $0x218] sm:$0xff]
      %v1319 = vld [vmem:[#allocation11 + $0x220] sm:$0xff]
      %v1320 = vld [vmem:[#allocation11 + $0x228] sm:$0xff]
      %v1321 = vld [vmem:[#allocation11 + $0x230] sm:$0xff]
      %v1322 = vld [vmem:[#allocation11 + $0x238] sm:$0xff]
      %v1323 = vld [vmem:[#allocation11 + $0x240] sm:$0xff]
      %v1324 = vld [vmem:[#allocation11 + $0x248] sm:$0xff]
      %v1325 = vld [vmem:[#allocation11 + $0x250] sm:$0xff]
      %v1326 = vld [vmem:[#allocation11 + $0x258] sm:$0xff]
      %v1327 = vld [vmem:[#allocation11 + $0x260] sm:$0xff]
      %v1328 = vld [vmem:[#allocation11 + $0x268] sm:$0xff]
      %v1329 = vld [vmem:[#allocation11 + $0x270] sm:$0xff]
      %v1330 = vld [vmem:[#allocation11 + $0x278] sm:$0xff]
      %v1331 = vld [vmem:[#allocation11 + $0x280] sm:$0xff]
      %v1332 = vld [vmem:[#allocation11 + $0x288] sm:$0xff]
      %v1333 = vld [vmem:[#allocation11 + $0x290] sm:$0xff]
      %v1334 = vld [vmem:[#allocation11 + $0x298] sm:$0xff]
      %v1335 = vld [vmem:[#allocation11 + $0x2a0] sm:$0xff]
      %v1336 = vld [vmem:[#allocation11 + $0x2a8] sm:$0xff]
      %v1337 = vld [vmem:[#allocation11 + $0x2b0] sm:$0xff]
      %v1338 = vld [vmem:[#allocation11 + $0x2b8] sm:$0xff]
      %v1339 = vld [vmem:[#allocation11 + $0x2c0] sm:$0xff]
      %v1340 = vld [vmem:[#allocation11 + $0x2c8] sm:$0xff]
      %v1341 = vld [vmem:[#allocation11 + $0x2d0] sm:$0xff]
      %v1342 = vld [vmem:[#allocation11 + $0x2d8] sm:$0xff]
      %v1343 = vld [vmem:[#allocation11 + $0x2e0] sm:$0xff]
      %v1344 = vld [vmem:[#allocation11 + $0x2e8] sm:$0xff]
      %v1345 = vld [vmem:[#allocation11 + $0x2f0] sm:$0xff]
      %v1346 = vld [vmem:[#allocation11 + $0x2f8] sm:$0xff]
      %v1347 = vld [vmem:[#allocation11 + $0x300] sm:$0xff]
      %v1348 = vld [vmem:[#allocation11 + $0x308] sm:$0xff]
      %v1349 = vld [vmem:[#allocation11 + $0x310] sm:$0xff]
      %v1350 = vld [vmem:[#allocation11 + $0x318] sm:$0xff]
      %v1351 = vld [vmem:[#allocation11 + $0x320] sm:$0xff]
      %v1352 = vld [vmem:[#allocation11 + $0x328] sm:$0xff]
      %v1353 = vld [vmem:[#allocation11 + $0x330] sm:$0xff]
      %v1354 = vld [vmem:[#allocation11 + $0x338] sm:$0xff]
      %v1355 = vld [vmem:[#allocation11 + $0x340] sm:$0xff]
      %v1356 = vld [vmem:[#allocation11 + $0x348] sm:$0xff]
      %v1357 = vld [vmem:[#allocation11 + $0x350] sm:$0xff]
      %v1358 = vld [vmem:[#allocation11 + $0x358] sm:$0xff]
      %v1359 = vld [vmem:[#allocation11 + $0x360] sm:$0xff]
      %v1360 = vld [vmem:[#allocation11 + $0x368] sm:$0xff]
      %v1361 = vld [vmem:[#allocation11 + $0x370] sm:$0xff]
      %v1362 = vld [vmem:[#allocation11 + $0x378] sm:$0xff]
      %v1363 = vld [vmem:[#allocation11 + $0x380] sm:$0xff]
      %v1364 = vld [vmem:[#allocation11 + $0x388] sm:$0xff]
      %v1365 = vld [vmem:[#allocation11 + $0x390] sm:$0xff]
      %v1366 = vld [vmem:[#allocation11 + $0x398] sm:$0xff]
      %v1367 = vld [vmem:[#allocation11 + $0x3a0] sm:$0xff]
      %v1368 = vld [vmem:[#allocation11 + $0x3a8] sm:$0xff]
      %v1369 = vld [vmem:[#allocation11 + $0x3b0] sm:$0xff]
      %v1370 = vld [vmem:[#allocation11 + $0x3b8] sm:$0xff]
      %v1371 = vld [vmem:[#allocation11 + $0x3c0] sm:$0xff]
      %v1372 = vld [vmem:[#allocation11 + $0x3c8] sm:$0xff]
      %v1373 = vld [vmem:[#allocation11 + $0x3d0] sm:$0xff]
      %v1374 = vld [vmem:[#allocation11 + $0x3d8] sm:$0xff]
      %v1375 = vld [vmem:[#allocation11 + $0x3e0] sm:$0xff]
      %v1376 = vld [vmem:[#allocation11 + $0x3e8] sm:$0xff]
      %v1377 = vld [vmem:[#allocation11 + $0x3f0] sm:$0xff]
      %v1378 = vld [vmem:[#allocation11 + $0x3f8] sm:$0xff]
      %v1507 = vunpack.c.l.b16 %v1251
      %v1508 = vunpack.c.h.b16 %v1251
      %v1509 = vunpack.c.l.b16 %v1252
      %v1510 = vunpack.c.h.b16 %v1252
      %v1511 = vunpack.c.l.b16 %v1253
      %v1512 = vunpack.c.h.b16 %v1253
      %v1513 = vunpack.c.l.b16 %v1254
      %v1514 = vunpack.c.h.b16 %v1254
      %v1515 = vunpack.c.l.b16 %v1255
      %v1516 = vunpack.c.h.b16 %v1255
      %v1517 = vunpack.c.l.b16 %v1256
      %v1518 = vunpack.c.h.b16 %v1256
      %v1519 = vunpack.c.l.b16 %v1257
      %v1520 = vunpack.c.h.b16 %v1257
      %v1521 = vunpack.c.l.b16 %v1258
      %v1522 = vunpack.c.h.b16 %v1258
      %v1523 = vunpack.c.l.b16 %v1259
      %v1524 = vunpack.c.h.b16 %v1259
      %v1525 = vunpack.c.l.b16 %v1260
      %v1526 = vunpack.c.h.b16 %v1260
      %v1527 = vunpack.c.l.b16 %v1261
      %v1528 = vunpack.c.h.b16 %v1261
      %v1529 = vunpack.c.l.b16 %v1262
      %v1530 = vunpack.c.h.b16 %v1262
      %v1531 = vunpack.c.l.b16 %v1263
      %v1532 = vunpack.c.h.b16 %v1263
      %v1533 = vunpack.c.l.b16 %v1264
      %v1534 = vunpack.c.h.b16 %v1264
      %v1535 = vunpack.c.l.b16 %v1265
      %v1536 = vunpack.c.h.b16 %v1265
      %v1537 = vunpack.c.l.b16 %v1266
      %v1538 = vunpack.c.h.b16 %v1266
      %v1539 = vunpack.c.l.b16 %v1267
      %v1540 = vunpack.c.h.b16 %v1267
      %v1541 = vunpack.c.l.b16 %v1268
      %v1542 = vunpack.c.h.b16 %v1268
      %v1543 = vunpack.c.l.b16 %v1269
      %v1544 = vunpack.c.h.b16 %v1269
      %v1545 = vunpack.c.l.b16 %v1270
      %v1546 = vunpack.c.h.b16 %v1270
      %v1547 = vunpack.c.l.b16 %v1271
      %v1548 = vunpack.c.h.b16 %v1271
      %v1549 = vunpack.c.l.b16 %v1272
      %v1550 = vunpack.c.h.b16 %v1272
      %v1551 = vunpack.c.l.b16 %v1273
      %v1552 = vunpack.c.h.b16 %v1273
      %v1553 = vunpack.c.l.b16 %v1274
      %v1554 = vunpack.c.h.b16 %v1274
      %v1555 = vunpack.c.l.b16 %v1275
      %v1556 = vunpack.c.h.b16 %v1275
      %v1557 = vunpack.c.l.b16 %v1276
      %v1558 = vunpack.c.h.b16 %v1276
      %v1559 = vunpack.c.l.b16 %v1277
      %v1560 = vunpack.c.h.b16 %v1277
      %v1561 = vunpack.c.l.b16 %v1278
      %v1562 = vunpack.c.h.b16 %v1278
      %v1563 = vunpack.c.l.b16 %v1279
      %v1564 = vunpack.c.h.b16 %v1279
      %v1565 = vunpack.c.l.b16 %v1280
      %v1566 = vunpack.c.h.b16 %v1280
      %v1567 = vunpack.c.l.b16 %v1281
      %v1568 = vunpack.c.h.b16 %v1281
      %v1569 = vunpack.c.l.b16 %v1282
      %v1570 = vunpack.c.h.b16 %v1282
      %v1571 = vunpack.c.l.b16 %v1283
      %v1572 = vunpack.c.h.b16 %v1283
      %v1573 = vunpack.c.l.b16 %v1284
      %v1574 = vunpack.c.h.b16 %v1284
      %v1575 = vunpack.c.l.b16 %v1285
      %v1576 = vunpack.c.h.b16 %v1285
      %v1577 = vunpack.c.l.b16 %v1286
      %v1578 = vunpack.c.h.b16 %v1286
      %v1579 = vunpack.c.l.b16 %v1287
      %v1580 = vunpack.c.h.b16 %v1287
      %v1581 = vunpack.c.l.b16 %v1288
      %v1582 = vunpack.c.h.b16 %v1288
      %v1583 = vunpack.c.l.b16 %v1289
      %v1584 = vunpack.c.h.b16 %v1289
      %v1585 = vunpack.c.l.b16 %v1290
      %v1586 = vunpack.c.h.b16 %v1290
      %v1587 = vunpack.c.l.b16 %v1291
      %v1588 = vunpack.c.h.b16 %v1291
      %v1589 = vunpack.c.l.b16 %v1292
      %v1590 = vunpack.c.h.b16 %v1292
      %v1591 = vunpack.c.l.b16 %v1293
      %v1592 = vunpack.c.h.b16 %v1293
      %v1593 = vunpack.c.l.b16 %v1294
      %v1594 = vunpack.c.h.b16 %v1294
      %v1595 = vunpack.c.l.b16 %v1295
      %v1596 = vunpack.c.h.b16 %v1295
      %v1597 = vunpack.c.l.b16 %v1296
      %v1598 = vunpack.c.h.b16 %v1296
      %v1599 = vunpack.c.l.b16 %v1297
      %v1600 = vunpack.c.h.b16 %v1297
      %v1601 = vunpack.c.l.b16 %v1298
      %v1602 = vunpack.c.h.b16 %v1298
      %v1603 = vunpack.c.l.b16 %v1299
      %v1604 = vunpack.c.h.b16 %v1299
      %v1605 = vunpack.c.l.b16 %v1300
      %v1606 = vunpack.c.h.b16 %v1300
      %v1607 = vunpack.c.l.b16 %v1301
      %v1608 = vunpack.c.h.b16 %v1301
      %v1609 = vunpack.c.l.b16 %v1302
      %v1610 = vunpack.c.h.b16 %v1302
      %v1611 = vunpack.c.l.b16 %v1303
      %v1612 = vunpack.c.h.b16 %v1303
      %v1613 = vunpack.c.l.b16 %v1304
      %v1614 = vunpack.c.h.b16 %v1304
      %v1615 = vunpack.c.l.b16 %v1305
      %v1616 = vunpack.c.h.b16 %v1305
      %v1617 = vunpack.c.l.b16 %v1306
      %v1618 = vunpack.c.h.b16 %v1306
      %v1619 = vunpack.c.l.b16 %v1307
      %v1620 = vunpack.c.h.b16 %v1307
      %v1621 = vunpack.c.l.b16 %v1308
      %v1622 = vunpack.c.h.b16 %v1308
      %v1623 = vunpack.c.l.b16 %v1309
      %v1624 = vunpack.c.h.b16 %v1309
      %v1625 = vunpack.c.l.b16 %v1310
      %v1626 = vunpack.c.h.b16 %v1310
      %v1627 = vunpack.c.l.b16 %v1311
      %v1628 = vunpack.c.h.b16 %v1311
      %v1629 = vunpack.c.l.b16 %v1312
      %v1630 = vunpack.c.h.b16 %v1312
      %v1631 = vunpack.c.l.b16 %v1313
      %v1632 = vunpack.c.h.b16 %v1313
      %v1633 = vunpack.c.l.b16 %v1314
      %v1634 = vunpack.c.h.b16 %v1314
      %v1635 = vunpack.c.l.b16 %v1315
      %v1636 = vunpack.c.h.b16 %v1315
      %v1637 = vunpack.c.l.b16 %v1316
      %v1638 = vunpack.c.h.b16 %v1316
      %v1639 = vunpack.c.l.b16 %v1317
      %v1640 = vunpack.c.h.b16 %v1317
      %v1641 = vunpack.c.l.b16 %v1318
      %v1642 = vunpack.c.h.b16 %v1318
      %v1643 = vunpack.c.l.b16 %v1319
      %v1644 = vunpack.c.h.b16 %v1319
      %v1645 = vunpack.c.l.b16 %v1320
      %v1646 = vunpack.c.h.b16 %v1320
      %v1647 = vunpack.c.l.b16 %v1321
      %v1648 = vunpack.c.h.b16 %v1321
      %v1649 = vunpack.c.l.b16 %v1322
      %v1650 = vunpack.c.h.b16 %v1322
      %v1651 = vunpack.c.l.b16 %v1323
      %v1652 = vunpack.c.h.b16 %v1323
      %v1653 = vunpack.c.l.b16 %v1324
      %v1654 = vunpack.c.h.b16 %v1324
      %v1655 = vunpack.c.l.b16 %v1325
      %v1656 = vunpack.c.h.b16 %v1325
      %v1657 = vunpack.c.l.b16 %v1326
      %v1658 = vunpack.c.h.b16 %v1326
      %v1659 = vunpack.c.l.b16 %v1327
      %v1660 = vunpack.c.h.b16 %v1327
      %v1661 = vunpack.c.l.b16 %v1328
      %v1662 = vunpack.c.h.b16 %v1328
      %v1663 = vunpack.c.l.b16 %v1329
      %v1664 = vunpack.c.h.b16 %v1329
      %v1665 = vunpack.c.l.b16 %v1330
      %v1666 = vunpack.c.h.b16 %v1330
      %v1667 = vunpack.c.l.b16 %v1331
      %v1668 = vunpack.c.h.b16 %v1331
      %v1669 = vunpack.c.l.b16 %v1332
      %v1670 = vunpack.c.h.b16 %v1332
      %v1671 = vunpack.c.l.b16 %v1333
      %v1672 = vunpack.c.h.b16 %v1333
      %v1673 = vunpack.c.l.b16 %v1334
      %v1674 = vunpack.c.h.b16 %v1334
      %v1675 = vunpack.c.l.b16 %v1335
      %v1676 = vunpack.c.h.b16 %v1335
      %v1677 = vunpack.c.l.b16 %v1336
      %v1678 = vunpack.c.h.b16 %v1336
      %v1679 = vunpack.c.l.b16 %v1337
      %v1680 = vunpack.c.h.b16 %v1337
      %v1681 = vunpack.c.l.b16 %v1338
      %v1682 = vunpack.c.h.b16 %v1338
      %v1683 = vunpack.c.l.b16 %v1339
      %v1684 = vunpack.c.h.b16 %v1339
      %v1685 = vunpack.c.l.b16 %v1340
      %v1686 = vunpack.c.h.b16 %v1340
      %v1687 = vunpack.c.l.b16 %v1341
      %v1688 = vunpack.c.h.b16 %v1341
      %v1689 = vunpack.c.l.b16 %v1342
      %v1690 = vunpack.c.h.b16 %v1342
      %v1691 = vunpack.c.l.b16 %v1343
      %v1692 = vunpack.c.h.b16 %v1343
      %v1693 = vunpack.c.l.b16 %v1344
      %v1694 = vunpack.c.h.b16 %v1344
      %v1695 = vunpack.c.l.b16 %v1345
      %v1696 = vunpack.c.h.b16 %v1345
      %v1697 = vunpack.c.l.b16 %v1346
      %v1698 = vunpack.c.h.b16 %v1346
      %v1699 = vunpack.c.l.b16 %v1347
      %v1700 = vunpack.c.h.b16 %v1347
      %v1701 = vunpack.c.l.b16 %v1348
      %v1702 = vunpack.c.h.b16 %v1348
      %v1703 = vunpack.c.l.b16 %v1349
      %v1704 = vunpack.c.h.b16 %v1349
      %v1705 = vunpack.c.l.b16 %v1350
      %v1706 = vunpack.c.h.b16 %v1350
      %v1707 = vunpack.c.l.b16 %v1351
      %v1708 = vunpack.c.h.b16 %v1351
      %v1709 = vunpack.c.l.b16 %v1352
      %v1710 = vunpack.c.h.b16 %v1352
      %v1711 = vunpack.c.l.b16 %v1353
      %v1712 = vunpack.c.h.b16 %v1353
      %v1713 = vunpack.c.l.b16 %v1354
      %v1714 = vunpack.c.h.b16 %v1354
      %v1715 = vunpack.c.l.b16 %v1355
      %v1716 = vunpack.c.h.b16 %v1355
      %v1717 = vunpack.c.l.b16 %v1356
      %v1718 = vunpack.c.h.b16 %v1356
      %v1719 = vunpack.c.l.b16 %v1357
      %v1720 = vunpack.c.h.b16 %v1357
      %v1721 = vunpack.c.l.b16 %v1358
      %v1722 = vunpack.c.h.b16 %v1358
      %v1723 = vunpack.c.l.b16 %v1359
      %v1724 = vunpack.c.h.b16 %v1359
      %v1725 = vunpack.c.l.b16 %v1360
      %v1726 = vunpack.c.h.b16 %v1360
      %v1727 = vunpack.c.l.b16 %v1361
      %v1728 = vunpack.c.h.b16 %v1361
      %v1729 = vunpack.c.l.b16 %v1362
      %v1730 = vunpack.c.h.b16 %v1362
      %v1731 = vunpack.c.l.b16 %v1363
      %v1732 = vunpack.c.h.b16 %v1363
      %v1733 = vunpack.c.l.b16 %v1364
      %v1734 = vunpack.c.h.b16 %v1364
      %v1735 = vunpack.c.l.b16 %v1365
      %v1736 = vunpack.c.h.b16 %v1365
      %v1737 = vunpack.c.l.b16 %v1366
      %v1738 = vunpack.c.h.b16 %v1366
      %v1739 = vunpack.c.l.b16 %v1367
      %v1740 = vunpack.c.h.b16 %v1367
      %v1741 = vunpack.c.l.b16 %v1368
      %v1742 = vunpack.c.h.b16 %v1368
      %v1743 = vunpack.c.l.b16 %v1369
      %v1744 = vunpack.c.h.b16 %v1369
      %v1745 = vunpack.c.l.b16 %v1370
      %v1746 = vunpack.c.h.b16 %v1370
      %v1747 = vunpack.c.l.b16 %v1371
      %v1748 = vunpack.c.h.b16 %v1371
      %v1749 = vunpack.c.l.b16 %v1372
      %v1750 = vunpack.c.h.b16 %v1372
      %v1751 = vunpack.c.l.b16 %v1373
      %v1752 = vunpack.c.h.b16 %v1373
      %v1753 = vunpack.c.l.b16 %v1374
      %v1754 = vunpack.c.h.b16 %v1374
      %v1755 = vunpack.c.l.b16 %v1375
      %v1756 = vunpack.c.h.b16 %v1375
      %v1757 = vunpack.c.l.b16 %v1376
      %v1758 = vunpack.c.h.b16 %v1376
      %v1759 = vunpack.c.l.b16 %v1377
      %v1760 = vunpack.c.h.b16 %v1377
      %v1761 = vunpack.c.l.b16 %v1378
      %v1762 = vunpack.c.h.b16 %v1378
      %v1763 = vpack.c.b16 %v1509, %v1507
      %v1764 = vpack.c.b16 %v1510, %v1508
      %v1765 = vpack.c.b16 %v1513, %v1511
      %v1766 = vpack.c.b16 %v1514, %v1512
      %v1767 = vpack.c.b16 %v1517, %v1515
      %v1768 = vpack.c.b16 %v1518, %v1516
      %v1769 = vpack.c.b16 %v1521, %v1519
      %v1770 = vpack.c.b16 %v1522, %v1520
      %v1771 = vpack.c.b16 %v1525, %v1523
      %v1772 = vpack.c.b16 %v1526, %v1524
      %v1773 = vpack.c.b16 %v1529, %v1527
      %v1774 = vpack.c.b16 %v1530, %v1528
      %v1775 = vpack.c.b16 %v1533, %v1531
      %v1776 = vpack.c.b16 %v1534, %v1532
      %v1777 = vpack.c.b16 %v1537, %v1535
      %v1778 = vpack.c.b16 %v1538, %v1536
      %v1779 = vpack.c.b16 %v1541, %v1539
      %v1780 = vpack.c.b16 %v1542, %v1540
      %v1781 = vpack.c.b16 %v1545, %v1543
      %v1782 = vpack.c.b16 %v1546, %v1544
      %v1783 = vpack.c.b16 %v1549, %v1547
      %v1784 = vpack.c.b16 %v1550, %v1548
      %v1785 = vpack.c.b16 %v1553, %v1551
      %v1786 = vpack.c.b16 %v1554, %v1552
      %v1787 = vpack.c.b16 %v1557, %v1555
      %v1788 = vpack.c.b16 %v1558, %v1556
      %v1789 = vpack.c.b16 %v1561, %v1559
      %v1790 = vpack.c.b16 %v1562, %v1560
      %v1791 = vpack.c.b16 %v1565, %v1563
      %v1792 = vpack.c.b16 %v1566, %v1564
      %v1793 = vpack.c.b16 %v1569, %v1567
      %v1794 = vpack.c.b16 %v1570, %v1568
      %v1795 = vpack.c.b16 %v1573, %v1571
      %v1796 = vpack.c.b16 %v1574, %v1572
      %v1797 = vpack.c.b16 %v1577, %v1575
      %v1798 = vpack.c.b16 %v1578, %v1576
      %v1799 = vpack.c.b16 %v1581, %v1579
      %v1800 = vpack.c.b16 %v1582, %v1580
      %v1801 = vpack.c.b16 %v1585, %v1583
      %v1802 = vpack.c.b16 %v1586, %v1584
      %v1803 = vpack.c.b16 %v1589, %v1587
      %v1804 = vpack.c.b16 %v1590, %v1588
      %v1805 = vpack.c.b16 %v1593, %v1591
      %v1806 = vpack.c.b16 %v1594, %v1592
      %v1807 = vpack.c.b16 %v1597, %v1595
      %v1808 = vpack.c.b16 %v1598, %v1596
      %v1809 = vpack.c.b16 %v1601, %v1599
      %v1810 = vpack.c.b16 %v1602, %v1600
      %v1811 = vpack.c.b16 %v1605, %v1603
      %v1812 = vpack.c.b16 %v1606, %v1604
      %v1813 = vpack.c.b16 %v1609, %v1607
      %v1814 = vpack.c.b16 %v1610, %v1608
      %v1815 = vpack.c.b16 %v1613, %v1611
      %v1816 = vpack.c.b16 %v1614, %v1612
      %v1817 = vpack.c.b16 %v1617, %v1615
      %v1818 = vpack.c.b16 %v1618, %v1616
      %v1819 = vpack.c.b16 %v1621, %v1619
      %v1820 = vpack.c.b16 %v1622, %v1620
      %v1821 = vpack.c.b16 %v1625, %v1623
      %v1822 = vpack.c.b16 %v1626, %v1624
      %v1823 = vpack.c.b16 %v1629, %v1627
      %v1824 = vpack.c.b16 %v1630, %v1628
      %v1825 = vpack.c.b16 %v1633, %v1631
      %v1826 = vpack.c.b16 %v1634, %v1632
      %v1827 = vpack.c.b16 %v1637, %v1635
      %v1828 = vpack.c.b16 %v1638, %v1636
      %v1829 = vpack.c.b16 %v1641, %v1639
      %v1830 = vpack.c.b16 %v1642, %v1640
      %v1831 = vpack.c.b16 %v1645, %v1643
      %v1832 = vpack.c.b16 %v1646, %v1644
      %v1833 = vpack.c.b16 %v1649, %v1647
      %v1834 = vpack.c.b16 %v1650, %v1648
      %v1835 = vpack.c.b16 %v1653, %v1651
      %v1836 = vpack.c.b16 %v1654, %v1652
      %v1837 = vpack.c.b16 %v1657, %v1655
      %v1838 = vpack.c.b16 %v1658, %v1656
      %v1839 = vpack.c.b16 %v1661, %v1659
      %v1840 = vpack.c.b16 %v1662, %v1660
      %v1841 = vpack.c.b16 %v1665, %v1663
      %v1842 = vpack.c.b16 %v1666, %v1664
      %v1843 = vpack.c.b16 %v1669, %v1667
      %v1844 = vpack.c.b16 %v1670, %v1668
      %v1845 = vpack.c.b16 %v1673, %v1671
      %v1846 = vpack.c.b16 %v1674, %v1672
      %v1847 = vpack.c.b16 %v1677, %v1675
      %v1848 = vpack.c.b16 %v1678, %v1676
      %v1849 = vpack.c.b16 %v1681, %v1679
      %v1850 = vpack.c.b16 %v1682, %v1680
      %v1851 = vpack.c.b16 %v1685, %v1683
      %v1852 = vpack.c.b16 %v1686, %v1684
      %v1853 = vpack.c.b16 %v1689, %v1687
      %v1854 = vpack.c.b16 %v1690, %v1688
      %v1855 = vpack.c.b16 %v1693, %v1691
      %v1856 = vpack.c.b16 %v1694, %v1692
      %v1857 = vpack.c.b16 %v1697, %v1695
      %v1858 = vpack.c.b16 %v1698, %v1696
      %v1859 = vpack.c.b16 %v1701, %v1699
      %v1860 = vpack.c.b16 %v1702, %v1700
      %v1861 = vpack.c.b16 %v1705, %v1703
      %v1862 = vpack.c.b16 %v1706, %v1704
      %v1863 = vpack.c.b16 %v1709, %v1707
      %v1864 = vpack.c.b16 %v1710, %v1708
      %v1865 = vpack.c.b16 %v1713, %v1711
      %v1866 = vpack.c.b16 %v1714, %v1712
      %v1867 = vpack.c.b16 %v1717, %v1715
      %v1868 = vpack.c.b16 %v1718, %v1716
      %v1869 = vpack.c.b16 %v1721, %v1719
      %v1870 = vpack.c.b16 %v1722, %v1720
      %v1871 = vpack.c.b16 %v1725, %v1723
      %v1872 = vpack.c.b16 %v1726, %v1724
      %v1873 = vpack.c.b16 %v1729, %v1727
      %v1874 = vpack.c.b16 %v1730, %v1728
      %v1875 = vpack.c.b16 %v1733, %v1731
      %v1876 = vpack.c.b16 %v1734, %v1732
      %v1877 = vpack.c.b16 %v1737, %v1735
      %v1878 = vpack.c.b16 %v1738, %v1736
      %v1879 = vpack.c.b16 %v1741, %v1739
      %v1880 = vpack.c.b16 %v1742, %v1740
      %v1881 = vpack.c.b16 %v1745, %v1743
      %v1882 = vpack.c.b16 %v1746, %v1744
      %v1883 = vpack.c.b16 %v1749, %v1747
      %v1884 = vpack.c.b16 %v1750, %v1748
      %v1885 = vpack.c.b16 %v1753, %v1751
      %v1886 = vpack.c.b16 %v1754, %v1752
      %v1887 = vpack.c.b16 %v1757, %v1755
      %v1888 = vpack.c.b16 %v1758, %v1756
      %v1889 = vpack.c.b16 %v1761, %v1759
      %v1890 = vpack.c.b16 %v1762, %v1760
      %2019 = vmatprep.subr.bf16.mxu0 %v1778
      %2020 = vmatpush1.bf16.msra.mxu0 %v1777
      %2021 = vmatprep.subr.bf16.mxu0 %v1776
      %2022 = vmatpush1.bf16.msra.mxu0 %v1775
      %2023 = vmatprep.subr.bf16.mxu0 %v1774
      %2024 = vmatpush1.bf16.msra.mxu0 %v1773
      %2025 = vmatprep.subr.bf16.mxu0 %v1772
      %2026 = vmatpush1.bf16.msra.mxu0 %v1771
      %2027 = vmatprep.subr.bf16.mxu0 %v1770
      %2028 = vmatpush1.bf16.msra.mxu0 %v1769
      %2029 = vmatprep.subr.bf16.mxu0 %v1768
      %2030 = vmatpush1.bf16.msra.mxu0 %v1767
      %2031 = vmatprep.subr.bf16.mxu0 %v1766
      %2032 = vmatpush1.bf16.msra.mxu0 %v1765
      %2033 = vmatprep.subr.bf16.mxu0 %v1764
      %2034 = vmatpush1.bf16.msra.mxu0 %v1763
      %2035 = vmatprep.subr.bf16.mxu0 %v1794
      %2036 = vmatpush2.bf16.msra.mxu0 %v1793
      %2037 = vmatprep.subr.bf16.mxu0 %v1792
      %2038 = vmatpush2.bf16.msra.mxu0 %v1791
      %2039 = vmatprep.subr.bf16.mxu0 %v1790
      %2040 = vmatpush2.bf16.msra.mxu0 %v1789
      %2041 = vmatprep.subr.bf16.mxu0 %v1788
      %2042 = vmatpush2.bf16.msra.mxu0 %v1787
      %2043 = vmatprep.subr.bf16.mxu0 %v1786
      %2044 = vmatpush2.bf16.msra.mxu0 %v1785
      %2045 = vmatprep.subr.bf16.mxu0 %v1784
      %2046 = vmatpush2.bf16.msra.mxu0 %v1783
      %2047 = vmatprep.subr.bf16.mxu0 %v1782
      %2048 = vmatpush2.bf16.msra.mxu0 %v1781
      %2049 = vmatprep.subr.bf16.mxu0 %v1780
      %2050 = vmatpush2.bf16.msra.mxu0 %v1779
      %2051 = vmatprep.mubr.bf16.mxu0 %v1244
      %2052 = vmatmul.mubr.bf16.gmra.mxu0 %v1243
      %v2053 = vpop.f32.mrf.mxu0
      %v2054 = vadd.f32 0.0, %v2053
      %v2055 = vpop.f32.mrf.mxu0
      %v2056 = vadd.f32 0.0, %v2055
      %v2057 = vpop.f32.mrf.mxu0
      %v2058 = vpop.f32.mrf.mxu0
      %2059 = vdwg.mxu0
      %2060 = vmatprep.subr.bf16.mxu0 %v1810
      %2061 = vmatpush1.bf16.msra.mxu0 %v1809
      %2062 = vmatprep.subr.bf16.mxu0 %v1808
      %2063 = vmatpush1.bf16.msra.mxu0 %v1807
      %2064 = vmatprep.subr.bf16.mxu0 %v1806
      %2065 = vmatpush1.bf16.msra.mxu0 %v1805
      %2066 = vmatprep.subr.bf16.mxu0 %v1804
      %2067 = vmatpush1.bf16.msra.mxu0 %v1803
      %2068 = vmatprep.subr.bf16.mxu0 %v1802
      %2069 = vmatpush1.bf16.msra.mxu0 %v1801
      %2070 = vmatprep.subr.bf16.mxu0 %v1800
      %2071 = vmatpush1.bf16.msra.mxu0 %v1799
      %2072 = vmatprep.subr.bf16.mxu0 %v1798
      %2073 = vmatpush1.bf16.msra.mxu0 %v1797
      %2074 = vmatprep.subr.bf16.mxu0 %v1796
      %2075 = vmatpush1.bf16.msra.mxu0 %v1795
      %2076 = vmatprep.subr.bf16.mxu0 %v1826
      %2077 = vmatpush2.bf16.msra.mxu0 %v1825
      %2078 = vmatprep.subr.bf16.mxu0 %v1824
      %2079 = vmatpush2.bf16.msra.mxu0 %v1823
      %2080 = vmatprep.subr.bf16.mxu0 %v1822
      %2081 = vmatpush2.bf16.msra.mxu0 %v1821
      %2082 = vmatprep.subr.bf16.mxu0 %v1820
      %2083 = vmatpush2.bf16.msra.mxu0 %v1819
      %2084 = vmatprep.subr.bf16.mxu0 %v1818
      %2085 = vmatpush2.bf16.msra.mxu0 %v1817
      %2086 = vmatprep.subr.bf16.mxu0 %v1816
      %2087 = vmatpush2.bf16.msra.mxu0 %v1815
      %2088 = vmatprep.subr.bf16.mxu0 %v1814
      %2089 = vmatpush2.bf16.msra.mxu0 %v1813
      %2090 = vmatprep.subr.bf16.mxu0 %v1812
      %2091 = vmatpush2.bf16.msra.mxu0 %v1811
      %2092 = vmatprep.mubr.bf16.mxu0 %v1246
      %2093 = vmatmul.mubr.bf16.gmra.mxu0 %v1245
      %v2094 = vpop.f32.mrf.mxu0
      %v2095 = vadd.f32 %v2054, %v2094
      %v2096 = vpop.f32.mrf.mxu0
      %v2097 = vadd.f32 %v2056, %v2096
      %v2098 = vpop.f32.mrf.mxu0
      %v2099 = vpop.f32.mrf.mxu0
      %2100 = vdwg.mxu0
      %2101 = vmatprep.subr.bf16.mxu0 %v1842
      %2102 = vmatpush1.bf16.msra.mxu0 %v1841
      %2103 = vmatprep.subr.bf16.mxu0 %v1840
      %2104 = vmatpush1.bf16.msra.mxu0 %v1839
      %2105 = vmatprep.subr.bf16.mxu0 %v1838
      %2106 = vmatpush1.bf16.msra.mxu0 %v1837
      %2107 = vmatprep.subr.bf16.mxu0 %v1836
      %2108 = vmatpush1.bf16.msra.mxu0 %v1835
      %2109 = vmatprep.subr.bf16.mxu0 %v1834
      %2110 = vmatpush1.bf16.msra.mxu0 %v1833
      %2111 = vmatprep.subr.bf16.mxu0 %v1832
      %2112 = vmatpush1.bf16.msra.mxu0 %v1831
      %2113 = vmatprep.subr.bf16.mxu0 %v1830
      %2114 = vmatpush1.bf16.msra.mxu0 %v1829
      %2115 = vmatprep.subr.bf16.mxu0 %v1828
      %2116 = vmatpush1.bf16.msra.mxu0 %v1827
      %2117 = vmatprep.subr.bf16.mxu0 %v1858
      %2118 = vmatpush2.bf16.msra.mxu0 %v1857
      %2119 = vmatprep.subr.bf16.mxu0 %v1856
      %2120 = vmatpush2.bf16.msra.mxu0 %v1855
      %2121 = vmatprep.subr.bf16.mxu0 %v1854
      %2122 = vmatpush2.bf16.msra.mxu0 %v1853
      %2123 = vmatprep.subr.bf16.mxu0 %v1852
      %2124 = vmatpush2.bf16.msra.mxu0 %v1851
      %2125 = vmatprep.subr.bf16.mxu0 %v1850
      %2126 = vmatpush2.bf16.msra.mxu0 %v1849
      %2127 = vmatprep.subr.bf16.mxu0 %v1848
      %2128 = vmatpush2.bf16.msra.mxu0 %v1847
      %2129 = vmatprep.subr.bf16.mxu0 %v1846
      %2130 = vmatpush2.bf16.msra.mxu0 %v1845
      %2131 = vmatprep.subr.bf16.mxu0 %v1844
      %2132 = vmatpush2.bf16.msra.mxu0 %v1843
      %2133 = vmatprep.mubr.bf16.mxu0 %v1248
      %2134 = vmatmul.mubr.bf16.gmra.mxu0 %v1247
      %v2135 = vpop.f32.mrf.mxu0
      %v2136 = vadd.f32 %v2095, %v2135
      %v2137 = vpop.f32.mrf.mxu0
      %v2138 = vadd.f32 %v2097, %v2137
      %v2139 = vpop.f32.mrf.mxu0
      %v2140 = vpop.f32.mrf.mxu0
      %2141 = vdwg.mxu0
      %2142 = vmatprep.subr.bf16.mxu0 %v1874
      %2143 = vmatpush1.bf16.msra.mxu0 %v1873
      %2144 = vmatprep.subr.bf16.mxu0 %v1872
      %2145 = vmatpush1.bf16.msra.mxu0 %v1871
      %2146 = vmatprep.subr.bf16.mxu0 %v1870
      %2147 = vmatpush1.bf16.msra.mxu0 %v1869
      %2148 = vmatprep.subr.bf16.mxu0 %v1868
      %2149 = vmatpush1.bf16.msra.mxu0 %v1867
      %2150 = vmatprep.subr.bf16.mxu0 %v1866
      %2151 = vmatpush1.bf16.msra.mxu0 %v1865
      %2152 = vmatprep.subr.bf16.mxu0 %v1864
      %2153 = vmatpush1.bf16.msra.mxu0 %v1863
      %2154 = vmatprep.subr.bf16.mxu0 %v1862
      %2155 = vmatpush1.bf16.msra.mxu0 %v1861
      %2156 = vmatprep.subr.bf16.mxu0 %v1860
      %2157 = vmatpush1.bf16.msra.mxu0 %v1859
      %2158 = vmatprep.subr.bf16.mxu0 %v1890
      %2159 = vmatpush2.bf16.msra.mxu0 %v1889
      %2160 = vmatprep.subr.bf16.mxu0 %v1888
      %2161 = vmatpush2.bf16.msra.mxu0 %v1887
      %2162 = vmatprep.subr.bf16.mxu0 %v1886
      %2163 = vmatpush2.bf16.msra.mxu0 %v1885
      %2164 = vmatprep.subr.bf16.mxu0 %v1884
      %2165 = vmatpush2.bf16.msra.mxu0 %v1883
      %2166 = vmatprep.subr.bf16.mxu0 %v1882
      %2167 = vmatpush2.bf16.msra.mxu0 %v1881
      %2168 = vmatprep.subr.bf16.mxu0 %v1880
      %2169 = vmatpush2.bf16.msra.mxu0 %v1879
      %2170 = vmatprep.subr.bf16.mxu0 %v1878
      %2171 = vmatpush2.bf16.msra.mxu0 %v1877
      %2172 = vmatprep.subr.bf16.mxu0 %v1876
      %2173 = vmatpush2.bf16.msra.mxu0 %v1875
      %2174 = vmatprep.mubr.bf16.mxu0 %v1250
      %2175 = vmatmul.mubr.bf16.gmra.mxu0 %v1249
      %v2176 = vpop.f32.mrf.mxu0
      %v2177 = vadd.f32 %v2136, %v2176
      %v2178 = vpop.f32.mrf.mxu0
      %v2179 = vadd.f32 %v2138, %v2178
      %v2180 = vpop.f32.mrf.mxu0
      %v2181 = vpop.f32.mrf.mxu0
      %2182 = vdwg.mxu0
      %v2183 = vld [vmem:[%s5] sm:$0x3]
      %v2185 = vlaneseq
      %v2186 = vshrl.u32 %v2185, 7
      %v2187 = vsub.s32 0, %v2186
      %v2188 = vrot.slane %v2183, %v2187
      %v2189 = vlaneseq
      %v2190 = vshrl.u32 %v2189, 7
      %v2191 = vsub.s32 1, %v2190
      %v2192 = vrot.slane %v2183, %v2191
      %v2195 = vmul.f32 %v2177, %v2188
      %v2196 = vmul.f32 %v2179, %v2192
      %v2197 = vld [vmem:[%s6] sm:$0x3]
      %v2199 = vlaneseq
      %v2200 = vshrl.u32 %v2199, 7
      %v2201 = vsub.s32 0, %v2200
      %v2202 = vrot.slane %v2197, %v2201
      %v2203 = vlaneseq
      %v2204 = vshrl.u32 %v2203, 7
      %v2205 = vsub.s32 1, %v2204
      %v2206 = vrot.slane %v2197, %v2205
      %v2209 = vadd.f32 %v2195, %v2202
      %v2210 = vadd.f32 %v2196, %v2206
      %vm2211 = vcmp.ge.f32.partialorder %v2209, 0.0
      %vm2212 = vcmp.ge.f32.partialorder %v2210, 0.0
      %v2213 = vmul.f32 %v2209, 0.01
      %v2214 = vmul.f32 %v2210, 0.01
      %v2215 = vsel %vm2211, %v2209, %v2213
      %v2216 = vsel %vm2212, %v2210, %v2214
      %v2217 = vpack.c.bf16 %v2215, %v2215
      %v2218 = vpack.c.bf16 %v2216, %v2216
      %v2219 = vld [vmem:[#allocation12] sm:$0xf]
      %v2220 = vld [vmem:[#allocation12 + $0x4] sm:$0xf]
      %v2221 = vld [vmem:[#allocation12 + $0x8] sm:$0xf]
      %v2222 = vld [vmem:[#allocation12 + $0xc] sm:$0xf]
      %v2223 = vld [vmem:[#allocation12 + $0x10] sm:$0xf]
      %v2224 = vld [vmem:[#allocation12 + $0x14] sm:$0xf]
      %v2225 = vld [vmem:[#allocation12 + $0x18] sm:$0xf]
      %v2226 = vld [vmem:[#allocation12 + $0x1c] sm:$0xf]
      %v2227 = vld [vmem:[#allocation12 + $0x20] sm:$0xf]
      %v2228 = vld [vmem:[#allocation12 + $0x24] sm:$0xf]
      %v2229 = vld [vmem:[#allocation12 + $0x28] sm:$0xf]
      %v2230 = vld [vmem:[#allocation12 + $0x2c] sm:$0xf]
      %v2231 = vld [vmem:[#allocation12 + $0x30] sm:$0xf]
      %v2232 = vld [vmem:[#allocation12 + $0x34] sm:$0xf]
      %v2233 = vld [vmem:[#allocation12 + $0x38] sm:$0xf]
      %v2234 = vld [vmem:[#allocation12 + $0x3c] sm:$0xf]
      %v2235 = vld [vmem:[#allocation12 + $0x40] sm:$0xf]
      %v2236 = vld [vmem:[#allocation12 + $0x44] sm:$0xf]
      %v2237 = vld [vmem:[#allocation12 + $0x48] sm:$0xf]
      %v2238 = vld [vmem:[#allocation12 + $0x4c] sm:$0xf]
      %v2239 = vld [vmem:[#allocation12 + $0x50] sm:$0xf]
      %v2240 = vld [vmem:[#allocation12 + $0x54] sm:$0xf]
      %v2241 = vld [vmem:[#allocation12 + $0x58] sm:$0xf]
      %v2242 = vld [vmem:[#allocation12 + $0x5c] sm:$0xf]
      %v2243 = vld [vmem:[#allocation12 + $0x60] sm:$0xf]
      %v2244 = vld [vmem:[#allocation12 + $0x64] sm:$0xf]
      %v2245 = vld [vmem:[#allocation12 + $0x68] sm:$0xf]
      %v2246 = vld [vmem:[#allocation12 + $0x6c] sm:$0xf]
      %v2247 = vld [vmem:[#allocation12 + $0x70] sm:$0xf]
      %v2248 = vld [vmem:[#allocation12 + $0x74] sm:$0xf]
      %v2249 = vld [vmem:[#allocation12 + $0x78] sm:$0xf]
      %v2250 = vld [vmem:[#allocation12 + $0x7c] sm:$0xf]
      %v2283 = vunpack.c.l.b16 %v2219
      %v2284 = vunpack.c.l.b16 %v2220
      %v2285 = vunpack.c.l.b16 %v2221
      %v2286 = vunpack.c.l.b16 %v2222
      %v2287 = vunpack.c.l.b16 %v2223
      %v2288 = vunpack.c.l.b16 %v2224
      %v2289 = vunpack.c.l.b16 %v2225
      %v2290 = vunpack.c.l.b16 %v2226
      %v2291 = vunpack.c.l.b16 %v2227
      %v2292 = vunpack.c.l.b16 %v2228
      %v2293 = vunpack.c.l.b16 %v2229
      %v2294 = vunpack.c.l.b16 %v2230
      %v2295 = vunpack.c.l.b16 %v2231
      %v2296 = vunpack.c.l.b16 %v2232
      %v2297 = vunpack.c.l.b16 %v2233
      %v2298 = vunpack.c.l.b16 %v2234
      %v2299 = vunpack.c.l.b16 %v2235
      %v2300 = vunpack.c.l.b16 %v2236
      %v2301 = vunpack.c.l.b16 %v2237
      %v2302 = vunpack.c.l.b16 %v2238
      %v2303 = vunpack.c.l.b16 %v2239
      %v2304 = vunpack.c.l.b16 %v2240
      %v2305 = vunpack.c.l.b16 %v2241
      %v2306 = vunpack.c.l.b16 %v2242
      %v2307 = vunpack.c.l.b16 %v2243
      %v2308 = vunpack.c.l.b16 %v2244
      %v2309 = vunpack.c.l.b16 %v2245
      %v2310 = vunpack.c.l.b16 %v2246
      %v2311 = vunpack.c.l.b16 %v2247
      %v2312 = vunpack.c.l.b16 %v2248
      %v2313 = vunpack.c.l.b16 %v2249
      %v2314 = vunpack.c.l.b16 %v2250
      %v2315 = vpack.c.b16 %v2284, %v2283
      %v2316 = vpack.c.b16 %v2286, %v2285
      %v2317 = vpack.c.b16 %v2288, %v2287
      %v2318 = vpack.c.b16 %v2290, %v2289
      %v2319 = vpack.c.b16 %v2292, %v2291
      %v2320 = vpack.c.b16 %v2294, %v2293
      %v2321 = vpack.c.b16 %v2296, %v2295
      %v2322 = vpack.c.b16 %v2298, %v2297
      %v2323 = vpack.c.b16 %v2300, %v2299
      %v2324 = vpack.c.b16 %v2302, %v2301
      %v2325 = vpack.c.b16 %v2304, %v2303
      %v2326 = vpack.c.b16 %v2306, %v2305
      %v2327 = vpack.c.b16 %v2308, %v2307
      %v2328 = vpack.c.b16 %v2310, %v2309
      %v2329 = vpack.c.b16 %v2312, %v2311
      %v2330 = vpack.c.b16 %v2314, %v2313
      %2347 = vmatprep.subr.bf16.mxu0 0
      %2348 = vmatpush1.bf16.msra.mxu0 %v2322
      %2349 = vmatprep.subr.bf16.mxu0 0
      %2350 = vmatpush1.bf16.msra.mxu0 %v2321
      %2351 = vmatprep.subr.bf16.mxu0 0
      %2352 = vmatpush1.bf16.msra.mxu0 %v2320
      %2353 = vmatprep.subr.bf16.mxu0 0
      %2354 = vmatpush1.bf16.msra.mxu0 %v2319
      %2355 = vmatprep.subr.bf16.mxu0 0
      %2356 = vmatpush1.bf16.msra.mxu0 %v2318
      %2357 = vmatprep.subr.bf16.mxu0 0
      %2358 = vmatpush1.bf16.msra.mxu0 %v2317
      %2359 = vmatprep.subr.bf16.mxu0 0
      %2360 = vmatpush1.bf16.msra.mxu0 %v2316
      %2361 = vmatprep.subr.bf16.mxu0 0
      %2362 = vmatpush1.bf16.msra.mxu0 %v2315
      %2363 = vmatprep.subr.bf16.mxu0 0
      %2364 = vmatpush2.bf16.msra.mxu0 %v2330
      %2365 = vmatprep.subr.bf16.mxu0 0
      %2366 = vmatpush2.bf16.msra.mxu0 %v2329
      %2367 = vmatprep.subr.bf16.mxu0 0
      %2368 = vmatpush2.bf16.msra.mxu0 %v2328
      %2369 = vmatprep.subr.bf16.mxu0 0
      %2370 = vmatpush2.bf16.msra.mxu0 %v2327
      %2371 = vmatprep.subr.bf16.mxu0 0
      %2372 = vmatpush2.bf16.msra.mxu0 %v2326
      %2373 = vmatprep.subr.bf16.mxu0 0
      %2374 = vmatpush2.bf16.msra.mxu0 %v2325
      %2375 = vmatprep.subr.bf16.mxu0 0
      %2376 = vmatpush2.bf16.msra.mxu0 %v2324
      %2377 = vmatprep.subr.bf16.mxu0 0
      %2378 = vmatpush2.bf16.msra.mxu0 %v2323
      %2379 = vmatprep.mubr.bf16.mxu0 %v2218
      %2380 = vmatmul.mubr.bf16.gmra.mxu0 %v2217
      %v2381 = vpop.f32.mrf.mxu0
      %v2382 = vadd.f32 0.0, %v2381
      %v2383 = vpop.f32.mrf.mxu0
      %v2384 = vpop.f32.mrf.mxu0
      %v2385 = vpop.f32.mrf.mxu0
      %2386 = vdwg.mxu0
      %v2387 = vld [vmem:[%s8] sm:$0x1]
      %v2389 = vlaneseq
      %v2390 = vshrl.u32 %v2389, 7
      %v2391 = vsub.s32 0, %v2390
      %v2392 = vrot.slane %v2387, %v2391
      %v2394 = vmul.f32 %v2382, %v2392
      %v2395 = vld [vmem:[%s9] sm:$0x1]
      %v2397 = vlaneseq
      %v2398 = vshrl.u32 %v2397, 7
      %v2399 = vsub.s32 0, %v2398
      %v2400 = vrot.slane %v2395, %v2399
      %v2402 = vadd.f32 %v2394, %v2400
      %vm2403 = vcmp.ge.f32.partialorder %v2402, 0.0
      %v2404 = vmul.f32 %v2402, 0.01
      %v2405 = vsel %vm2403, %v2402, %v2404
      %v2406 = vpack.c.bf16 %v2405, %v2405
      %v2407 = vld [vmem:[#allocation14] sm:$0xf]
      %v2408 = vld [vmem:[#allocation14 + $0x4] sm:$0xf]
      %v2409 = vld [vmem:[#allocation14 + $0x8] sm:$0xf]
      %v2410 = vld [vmem:[#allocation14 + $0xc] sm:$0xf]
      %v2411 = vld [vmem:[#allocation14 + $0x10] sm:$0xf]
      %v2412 = vld [vmem:[#allocation14 + $0x14] sm:$0xf]
      %v2413 = vld [vmem:[#allocation14 + $0x18] sm:$0xf]
      %v2414 = vld [vmem:[#allocation14 + $0x1c] sm:$0xf]
      %v2415 = vld [vmem:[#allocation14 + $0x20] sm:$0xf]
      %v2416 = vld [vmem:[#allocation14 + $0x24] sm:$0xf]
      %v2417 = vld [vmem:[#allocation14 + $0x28] sm:$0xf]
      %v2418 = vld [vmem:[#allocation14 + $0x2c] sm:$0xf]
      %v2419 = vld [vmem:[#allocation14 + $0x30] sm:$0xf]
      %v2420 = vld [vmem:[#allocation14 + $0x34] sm:$0xf]
      %v2421 = vld [vmem:[#allocation14 + $0x38] sm:$0xf]
      %v2422 = vld [vmem:[#allocation14 + $0x3c] sm:$0xf]
      %v2423 = vld [vmem:[%s11] sm:$0x1]
      %v2425 = vlaneseq
      %v2426 = vshrl.u32 %v2425, 7
      %v2427 = vsub.s32 0, %v2426
      %v2428 = vrot.slane %v2423, %v2427
      %v2446 = vunpack.c.l.b16 %v2407
      %v2447 = vunpack.c.l.b16 %v2408
      %v2448 = vunpack.c.l.b16 %v2409
      %v2449 = vunpack.c.l.b16 %v2410
      %v2450 = vunpack.c.l.b16 %v2411
      %v2451 = vunpack.c.l.b16 %v2412
      %v2452 = vunpack.c.l.b16 %v2413
      %v2453 = vunpack.c.l.b16 %v2414
      %v2454 = vunpack.c.l.b16 %v2415
      %v2455 = vunpack.c.l.b16 %v2416
      %v2456 = vunpack.c.l.b16 %v2417
      %v2457 = vunpack.c.l.b16 %v2418
      %v2458 = vunpack.c.l.b16 %v2419
      %v2459 = vunpack.c.l.b16 %v2420
      %v2460 = vunpack.c.l.b16 %v2421
      %v2461 = vunpack.c.l.b16 %v2422
      %v2462 = vpack.c.b16 %v2447, %v2446
      %v2463 = vpack.c.b16 %v2449, %v2448
      %v2464 = vpack.c.b16 %v2451, %v2450
      %v2465 = vpack.c.b16 %v2453, %v2452
      %v2466 = vpack.c.b16 %v2455, %v2454
      %v2467 = vpack.c.b16 %v2457, %v2456
      %v2468 = vpack.c.b16 %v2459, %v2458
      %v2469 = vpack.c.b16 %v2461, %v2460
      %2478 = vmatprep.subr.bf16.mxu0 0
      %2479 = vmatpush1.bf16.msra.mxu0 %v2469
      %2480 = vmatprep.subr.bf16.mxu0 0
      %2481 = vmatpush1.bf16.msra.mxu0 %v2468
      %2482 = vmatprep.subr.bf16.mxu0 0
      %2483 = vmatpush1.bf16.msra.mxu0 %v2467
      %2484 = vmatprep.subr.bf16.mxu0 0
      %2485 = vmatpush1.bf16.msra.mxu0 %v2466
      %2486 = vmatprep.subr.bf16.mxu0 0
      %2487 = vmatpush1.bf16.msra.mxu0 %v2465
      %2488 = vmatprep.subr.bf16.mxu0 0
      %2489 = vmatpush1.bf16.msra.mxu0 %v2464
      %2490 = vmatprep.subr.bf16.mxu0 0
      %2491 = vmatpush1.bf16.msra.mxu0 %v2463
      %2492 = vmatprep.subr.bf16.mxu0 0
      %2493 = vmatpush1.bf16.msra.mxu0 %v2462
      %2494 = vmatprep.subr.bf16.mxu0 0
      %2495 = vmatpush2.bf16.msra.mxu0 0
      %2496 = vmatprep.subr.bf16.mxu0 0
      %2497 = vmatpush2.bf16.msra.mxu0 0
      %2498 = vmatprep.subr.bf16.mxu0 0
      %2499 = vmatpush2.bf16.msra.mxu0 0
      %2500 = vmatprep.subr.bf16.mxu0 0
      %2501 = vmatpush2.bf16.msra.mxu0 0
      %2502 = vmatprep.subr.bf16.mxu0 0
      %2503 = vmatpush2.bf16.msra.mxu0 0
      %2504 = vmatprep.subr.bf16.mxu0 0
      %2505 = vmatpush2.bf16.msra.mxu0 0
      %2506 = vmatprep.subr.bf16.mxu0 0
      %2507 = vmatpush2.bf16.msra.mxu0 0
      %2508 = vmatprep.subr.bf16.mxu0 0
      %2509 = vmatpush2.bf16.msra.mxu0 0
      %2510 = vmatprep.mubr.bf16.mxu0 0
      %2511 = vmatmul.mubr.bf16.gmra.mxu0 %v2406
      %v2512 = vpop.f32.mrf.mxu0
      %v2513 = vadd.f32 %v2428, %v2512
      %v2514 = vpop.f32.mrf.mxu0
      %v2515 = vpop.f32.mrf.mxu0
      %v2516 = vpop.f32.mrf.mxu0
      %2517 = vdwg.mxu0
      %2518 = vst [vmem:[#allocation15] sm:$0xff] %v2513
    $region85: #{tpu_custom_call.1} parent=1 // pred_fallthru
      _
    // Predicated region
    $region86: #{tpu_custom_call.1} parent=1 // pred_check
      _
    $region87: #{tpu_custom_call.1} parent=1 // pred_check_branch
      %2520 = sbr.rel (0) target = $region89
    $region88: #{tpu_custom_call.1} parent=1 // pred_region
      %s2522 = ssub.s32 128, 128
      %2523 = vsyncadd [#allocation5], %s2522
      %s2525 = sshll.u32 [#allocation15], 4
      %s2526 = int_to_ptr.vmem [resolvable:$true] %s2525
      %2528 = dma.vmem_to_hbm [thread:$0]  %s2526, 128, %s12, [#allocation5]
    $region89: #{tpu_custom_call.1} parent=1 // pred_fallthru
      _
    // Predicated region
    $region90: #{tpu_custom_call.1} parent=1 // pred_check
      _
    $region91: #{tpu_custom_call.1} parent=1 // pred_check_branch
      %2530 = sbr.rel (0) target = $region93
    $region92: #{tpu_custom_call.1} parent=1 // pred_region
      %2531 = dma.done [#allocation5], 128
    $region93: #{tpu_custom_call.1} parent=1 // pred_fallthru
      _
    %2532 = vsyncpa [#allocation4], 1
    %2533 = vsyncpa [#allocation7], 1
    %2534 = vsyncpa [#allocation10], 1
    %2535 = vsyncpa [#allocation13], 1
    %2536 = vsyncpa [#allocation5], 1

</llo_original>
